<compile_context>
chip_gen: v7x
topology: tpu7x:2x2x1
jax: 0.10.0
libtpu: 0.0.40
codegen_flags: <defaults>
</compile_context>

<pallas_src>
import numpy as np
import jax
import jax.numpy as jnp
from jax.experimental import pallas as pl
from jax.experimental.pallas import tpu as pltpu


def _round_up(x, m):
    return (x + m - 1) // m * m


def _choose_blocking(batch, cap=64):
    """Pick (block_b, padded_batch).

    block_b is always a multiple of 16 so every in-kernel reshape stays
    sublane-tile aligned (bf16 packs 16 rows / vreg), and the grid has length
    2 whenever the batch is big enough (v7x shards 'parallel' grid axes across
    its two TensorCores).  The batch is zero-padded up to a multiple of
    block_b, so there is no divisor search and no prime-batch perf cliff.
    """
    if batch <= 16:
        return 16, 16
    half = _round_up((batch + 1) // 2, 16)
    if half <= cap:
        return half, 2 * half
    steps = -(-batch // cap)
    if steps % 2:                       # keep both v7x cores evenly loaded
        steps += 1
    return cap, steps * cap


# ----------------------------------------------------------------------------
# Fused 2-layer backbone kernel
#   conv3x3(pad=1) + bias + ReLU + maxpool2x2, twice, all in VMEM.
# Row layout everywhere is h-major / image-minor: row = h * block_b + image,
# so H padding is two shared zero-row groups and every reshape is tile-aligned.
# ----------------------------------------------------------------------------
def _backbone_kernel(x_ref, w1_ref, b1_ref, w2_ref, b2_ref, o_ref):
    """
    x_ref  : (H1, bb, K1)     bf16   input rows, K1 = W1*Cin1, ordered (w, cin)
    w1_ref : (3, K1, 2*Nh1)   bf16   banded conv1 weights, cols [even-w | odd-w]
    b1_ref : (1, Nh1)         f32    conv1 bias tiled over (wp, cout)
    w2_ref : (3, K2, 2*Nh2)   bf16   banded conv2 weights (K2 == Nh1)
    b2_ref : (1, 2*Nh2)       f32    conv2 bias tiled over both column halves
    o_ref  : (H1//4, bb, 2*Nh2) f32  layer-2 output after bias/ReLU/h-pool;
                                     the final 64-lane w-pool max happens in
                                     the wrapper so the store stays 128 lanes.
    """
    H1, bb, K1 = x_ref.shape
    N1 = w1_ref.shape[2]
    Nh1 = N1 // 2                      # == K2 (layer-2 input row width)
    K2 = w2_ref.shape[1]
    N2 = w2_ref.shape[2]
    H2, H4 = H1 // 2, H1 // 4
    f32, bf16 = jnp.float32, jnp.bfloat16

    def conv_rows(xp, w_ref, rows):
        # xp: (rows+2, bb, K) bf16  ->  (rows*bb, N) f32 conv output rows.
        # One big MXU dot per dy band (M = rows*bb), accumulated in f32
        # (chains through the MRB on v7x; two VPU adds on v5e/v6e).
        k = xp.shape[-1]
        acc = None
        for dy in range(3):
            lhs = xp[dy:dy + rows].reshape(rows * bb, k)
            part = jnp.dot(lhs, w_ref[dy], preferred_element_type=f32)
            acc = part if acc is None else acc + part
        return acc

    # ---- layer 1: conv3x3 (x-pad baked into weights) + bias + ReLU + pool ---
    x = x_ref[...]                                       # (H1, bb, K1) bf16
    zr1 = jnp.zeros((1, bb, K1), bf16)
    xp1 = jnp.concatenate([zr1, x, zr1], axis=0)         # shared H padding rows
    h1 = conv_rows(xp1, w1_ref, H1)                      # (H1*bb, 2*Nh1) f32
    pw1 = jnp.maximum(h1[:, :Nh1], h1[:, Nh1:])          # horizontal (w) pool
    pw1 = jnp.maximum(pw1 + b1_ref[...], 0.0)            # bias + ReLU (after max)
    pw1 = pw1.reshape(H2, 2, bb, Nh1)
    a1 = jnp.maximum(pw1[:, 0], pw1[:, 1])               # vertical (h) pool
    a1 = a1.astype(bf16)                                 # (H2, bb, K2) layer-2 rows

    # ---- layer 2 ------------------------------------------------------------
    zr2 = jnp.zeros((1, bb, K2), bf16)
    xp2 = jnp.concatenate([zr2, a1, zr2], axis=0)
    h2 = conv_rows(xp2, w2_ref, H2)                      # (H2*bb, 2*Nh2) f32
    h2 = jnp.maximum(h2 + b2_ref[...], 0.0)              # bias + ReLU
    h2 = h2.reshape(H4, 2, bb, N2)
    o_ref[...] = jnp.maximum(h2[:, 0], h2[:, 1])         # h-pool; 128-lane store


def _fused_backbone(x_t, w1, b1, w2, b2, *, block_b):
    """x_t: (H1, Bp, K1) bf16 -> (H1//4, Bp, 2*Nh2) f32 (pre w-pool)."""
    H1, Bp, K1 = x_t.shape
    N1 = w1.shape[2]
    K2, N2 = w2.shape[1], w2.shape[2]
    H4 = H1 // 4
    grid = (Bp // block_b,)
    return pl.pallas_call(
        _backbone_kernel,
        out_shape=jax.ShapeDtypeStruct((H4, Bp, N2), jnp.float32),
        grid=grid,
        in_specs=[
            pl.BlockSpec((H1, block_b, K1), lambda g: (0, g, 0)),
            pl.BlockSpec((3, K1, N1), lambda g: (0, 0, 0)),
            pl.BlockSpec((1, N1 // 2), lambda g: (0, 0)),
            pl.BlockSpec((3, K2, N2), lambda g: (0, 0, 0)),
            pl.BlockSpec((1, N2), lambda g: (0, 0)),
        ],
        out_specs=pl.BlockSpec((H4, block_b, N2), lambda g: (0, g, 0)),
        compiler_params=pltpu.CompilerParams(
            dimension_semantics=("parallel",)),
    )(x_t, w1, b1, w2, b2)


# ----------------------------------------------------------------------------
# Precomputed per-layer operands (built once at init)
# ----------------------------------------------------------------------------
def _make_layer_weights(w_oihw, bias, width):
    """Banded (Toeplitz-over-x) conv weights with the x-direction zero padding
    folded in (K = W*Cin, no pad columns) and the even/odd output-w column
    groups merged into one RHS:  shape (3, K, 2*Nh), Nh = (W//2)*Cout."""
    cout, cin = int(w_oihw.shape[0]), int(w_oihw.shape[1])
    W = width
    Wh = W // 2
    K = W * cin
    Nh = Wh * cout
    wk = np.transpose(np.asarray(w_oihw, np.float32), (2, 3, 1, 0))  # (dy,dx,ci,co)
    Wm = np.zeros((3, K, 2 * Nh), np.float32)
    for parity in range(2):
        for wp in range(Wh):
            w = 2 * wp + parity
            col = parity * Nh + wp * cout
            for dx in range(3):
                xcol = w + dx - 1
                if 0 <= xcol < W:          # out-of-range -> stays zero (the pad)
                    Wm[:, xcol * cin:(xcol + 1) * cin, col:col + cout] = wk[:, dx]
    b_half = np.tile(np.asarray(bias, np.float32), Wh).reshape(1, Nh)
    return jnp.asarray(Wm, jnp.bfloat16), jnp.asarray(b_half, jnp.float32)


# ----------------------------------------------------------------------------
# Backbone feature extractor ("model_func") and MetaTemplate
# ----------------------------------------------------------------------------
class ConvFeature:
    """Small deterministic conv backbone: 2x [conv3x3 -> ReLU -> maxpool2]."""

    def __init__(self, key, in_channels=3, hidden=16, spatial=16):
        assert spatial % 4 == 0
        k1, k2, k3, k4 = jax.random.split(key, 4)
        self.w1 = 0.1 * jax.random.normal(k1, (hidden, in_channels, 3, 3), jnp.float32)
        self.b1 = 0.1 * jax.random.normal(k2, (hidden,), jnp.float32)
        self.w2 = 0.1 * jax.random.normal(k3, (hidden, hidden, 3, 3), jnp.float32)
        self.b2 = 0.1 * jax.random.normal(k4, (hidden,), jnp.float32)
        self.hidden = hidden
        self.spatial = spatial
        self.in_channels = in_channels
        self.final_feat_dim = hidden * (spatial // 4) * (spatial // 4)

        # Kernel-side operands built once (banded weights, tiled biases).
        self._w1m, self._b1h = _make_layer_weights(self.w1, self.b1, spatial)
        self._w2m, b2h = _make_layer_weights(self.w2, self.b2, spatial // 2)
        self._b2f = jnp.concatenate([b2h, b2h], axis=1)   # bias for both halves
        # Layer-2 contraction width must equal layer-1 pooled row width.
        assert self._w2m.shape[1] == self._w1m.shape[2] // 2
        self._forward = jax.jit(self._forward_impl)

    def _forward_impl(self, x_nchw):
        B, C, H, W = x_nchw.shape
        block_b, Bp = _choose_blocking(B)
        # NCHW -> h-major rows (H, B, W*C), bf16 streaming input.
        x = jnp.transpose(x_nchw, (2, 0, 3, 1)).reshape(H, B, W * C)
        x = x.astype(jnp.bfloat16)
        if Bp > B:
            x = jnp.pad(x, ((0, 0), (0, Bp - B), (0, 0)))
        o = _fused_backbone(x, self._w1m, self._b1h, self._w2m, self._b2f,
                            block_b=block_b)              # (H//4, Bp, 2*Nh2)
        nh2 = o.shape[-1] // 2
        o = jnp.maximum(o[..., :nh2], o[..., nh2:])       # final (tiny) w-pool
        H4, W4 = H // 4, W // 4
        o = o[:, :B, :].reshape(H4, B, W4, self.hidden)   # (hp, b, wp, c)
        o = jnp.transpose(o, (1, 3, 0, 2))                # (b, c, hp, wp) NCHW
        return o.reshape(B, -1)

    def forward(self, x_nchw):
        return self._forward(x_nchw)


class MetaTemplate:
    def __init__(self, model_func, n_way, n_support, n_query):
        self.n_way = n_way
        self.n_support = n_support
        self.n_query = n_query
        self.feature = model_func
        self.feat_dim = self.feature.final_feat_dim

    def forward(self, x):
        return self.feature.forward(x)

    def parse_feature(self, x, is_feature):
        if is_feature:
            z_all = x
        else:
            x = x.reshape((self.n_way * (self.n_support + self.n_query),) + x.shape[2:])
            z_all = self.feature.forward(x)
            z_all = z_all.reshape(self.n_way, self.n_support + self.n_query, -1)
        z_support = z_all[:, : self.n_support]
        z_query = z_all[:, self.n_support:]
        return z_support, z_query

    # set_forward / set_forward_loss are abstract in the PyTorch module.


# ----------------------------------------------------------------------------
# Pure-JAX reference (same bf16 quantization of the MXU operands)
# ----------------------------------------------------------------------------
def _reference_forward(x_nchw, feature):
    f32 = jnp.float32

    def block(x_nhwc, w_oihw, bias):
        xq = x_nhwc.astype(jnp.bfloat16).astype(f32)
        wq = jnp.transpose(w_oihw, (2, 3, 1, 0)).astype(jnp.bfloat16).astype(f32)
        y = jax.lax.conv_general_dilated(
            xq, wq, window_strides=(1, 1), padding="SAME",
            dimension_numbers=("NHWC", "HWIO", "NHWC"),
            precision=jax.lax.Precision.HIGHEST)
        y = jnp.maximum(y + bias.reshape(1, 1, 1, -1), 0.0)
        return jnp.maximum(
            jnp.maximum(y[:, 0::2, 0::2, :], y[:, 0::2, 1::2, :]),
            jnp.maximum(y[:, 1::2, 0::2, :], y[:, 1::2, 1::2, :]))

    x = jnp.transpose(x_nchw, (0, 2, 3, 1)).astype(f32)
    p1 = block(x, feature.w1, feature.b1)
    p2 = block(p1, feature.w2, feature.b2)
    return jnp.transpose(p2, (0, 3, 1, 2)).reshape(x_nchw.shape[0], -1)


# ----------------------------------------------------------------------------
if __name__ == "__main__":
    key = jax.random.PRNGKey(0)
    k_feat, k_x = jax.random.split(key)

    n_way, n_support, n_query = 2, 2, 2
    C, S = 3, 16
    B = n_way * (n_support + n_query)

    feature = ConvFeature(k_feat, in_channels=C, hidden=16, spatial=S)
    model = MetaTemplate(feature, n_way, n_support, n_query)

    # forward(): flat NCHW batch, like the PyTorch module's forward.
    x_flat = jax.random.normal(k_x, (B, C, S, S), jnp.float32)
    out = jax.block_until_ready(model.forward(x_flat))
    assert out.shape == (B, model.feat_dim), out.shape

    # numerical check against a pure-JAX reference (same bf16 quantization).
    ref = jax.block_until_ready(_reference_forward(x_flat, feature))
    np.testing.assert_allclose(np.asarray(out, np.float32),
                               np.asarray(ref, np.float32),
                               rtol=2e-2, atol=2e-2)

    # parse_feature(): episode-shaped input (n_way, n_support+n_query, C, H, W).
    x_episode = x_flat.reshape(n_way, n_support + n_query, C, S, S)
    z_support, z_query = model.parse_feature(x_episode, is_feature=False)
    z_support = jax.block_until_ready(z_support)
    z_query = jax.block_until_ready(z_query)
    assert z_support.shape == (n_way, n_support, model.feat_dim)
    assert z_query.shape == (n_way, n_query, model.feat_dim)

    print("KERNEL_OK")
</pallas_src>

<mosaic_0001>
module attributes {stable_mosaic.version = 11 : i64} {
  func.func @_backbone_kernel(%arg0: i32, %arg1: memref<16x16x48xbf16, #tpu.memory_space<vmem>>, %arg2: memref<3x48x256xbf16, #tpu.memory_space<vmem>>, %arg3: memref<1x128xf32, #tpu.memory_space<vmem>>, %arg4: memref<3x128x128xbf16, #tpu.memory_space<vmem>>, %arg5: memref<1x128xf32, #tpu.memory_space<vmem>>, %arg6: memref<4x16x128xf32, #tpu.memory_space<vmem>>) attributes {dimension_semantics = [#tpu.dimension_semantics<parallel>], iteration_bounds = array<i64: 1>, scalar_prefetch = 0 : i64, scratch_operands = 0 : i64, tpu.core_type = #tpu.core_type<tc>, window_params = [{transform_indices = @transform_0, window_bounds = array<i64: 16, 16, 48>}, {pipeline_mode = #tpu.pipeline_mode<synchronous>, transform_indices = @transform_1, window_bounds = array<i64: 3, 48, 256>}, {pipeline_mode = #tpu.pipeline_mode<synchronous>, transform_indices = @transform_2, window_bounds = array<i64: 1, 128>}, {pipeline_mode = #tpu.pipeline_mode<synchronous>, transform_indices = @transform_3, window_bounds = array<i64: 3, 128, 128>}, {pipeline_mode = #tpu.pipeline_mode<synchronous>, transform_indices = @transform_4, window_bounds = array<i64: 1, 128>}, {transform_indices = @transform_5, window_bounds = array<i64: 4, 16, 128>}]} {
    %c0 = arith.constant 0 : index
    %c0_0 = arith.constant 0 : index
    %c0_1 = arith.constant 0 : index
    %0 = vector.load %arg1[%c0, %c0_0, %c0_1] : memref<16x16x48xbf16, #tpu.memory_space<vmem>>, vector<16x16x48xbf16>
    %cst = arith.constant 0.000000e+00 : bf16
    %1 = vector.broadcast %cst : bf16 to vector<1x16x48xbf16>
    %2 = tpu.concatenate %1, %0, %1 in 0 : vector<1x16x48xbf16>, vector<16x16x48xbf16>, vector<1x16x48xbf16> -> vector<18x16x48xbf16>
    %3 = vector.extract_strided_slice %2 {offsets = [0, 0, 0], sizes = [16, 16, 48], strides = [1, 1, 1]} : vector<18x16x48xbf16> to vector<16x16x48xbf16>
    %4 = vector.shape_cast %3 : vector<16x16x48xbf16> to vector<256x48xbf16>
    %c0_2 = arith.constant 0 : index
    %c0_3 = arith.constant 0 : index
    %c0_4 = arith.constant 0 : index
    %5 = vector.load %arg2[%c0_2, %c0_3, %c0_4] : memref<3x48x256xbf16, #tpu.memory_space<vmem>>, vector<1x48x256xbf16>
    %6 = vector.shape_cast %5 : vector<1x48x256xbf16> to vector<48x256xbf16>
    %cst_5 = arith.constant dense<0.000000e+00> : vector<256x256xf32>
    %7 = tpu.matmul %4, %6, %cst_5 {dimension_numbers = #tpu.dot_dimension_numbers<[1], [0], [0], [1], [0, 0, 1, 1], [], []>} : vector<256x48xbf16>, vector<48x256xbf16>, vector<256x256xf32> -> vector<256x256xf32>
    %8 = vector.extract_strided_slice %2 {offsets = [1, 0, 0], sizes = [16, 16, 48], strides = [1, 1, 1]} : vector<18x16x48xbf16> to vector<16x16x48xbf16>
    %9 = vector.shape_cast %8 : vector<16x16x48xbf16> to vector<256x48xbf16>
    %c1 = arith.constant 1 : index
    %c0_6 = arith.constant 0 : index
    %c0_7 = arith.constant 0 : index
    %10 = vector.load %arg2[%c1, %c0_6, %c0_7] : memref<3x48x256xbf16, #tpu.memory_space<vmem>>, vector<1x48x256xbf16>
    %11 = vector.shape_cast %10 : vector<1x48x256xbf16> to vector<48x256xbf16>
    %cst_8 = arith.constant dense<0.000000e+00> : vector<256x256xf32>
    %12 = tpu.matmul %9, %11, %cst_8 {dimension_numbers = #tpu.dot_dimension_numbers<[1], [0], [0], [1], [0, 0, 1, 1], [], []>} : vector<256x48xbf16>, vector<48x256xbf16>, vector<256x256xf32> -> vector<256x256xf32>
    %13 = arith.addf %7, %12 : vector<256x256xf32>
    %14 = vector.extract_strided_slice %2 {offsets = [2, 0, 0], sizes = [16, 16, 48], strides = [1, 1, 1]} : vector<18x16x48xbf16> to vector<16x16x48xbf16>
    %15 = vector.shape_cast %14 : vector<16x16x48xbf16> to vector<256x48xbf16>
    %c2 = arith.constant 2 : index
    %c0_9 = arith.constant 0 : index
    %c0_10 = arith.constant 0 : index
    %16 = vector.load %arg2[%c2, %c0_9, %c0_10] : memref<3x48x256xbf16, #tpu.memory_space<vmem>>, vector<1x48x256xbf16>
    %17 = vector.shape_cast %16 : vector<1x48x256xbf16> to vector<48x256xbf16>
    %cst_11 = arith.constant dense<0.000000e+00> : vector<256x256xf32>
    %18 = tpu.matmul %15, %17, %cst_11 {dimension_numbers = #tpu.dot_dimension_numbers<[1], [0], [0], [1], [0, 0, 1, 1], [], []>} : vector<256x48xbf16>, vector<48x256xbf16>, vector<256x256xf32> -> vector<256x256xf32>
    %19 = arith.addf %13, %18 : vector<256x256xf32>
    %20 = vector.extract_strided_slice %19 {offsets = [0, 0], sizes = [256, 128], strides = [1, 1]} : vector<256x256xf32> to vector<256x128xf32>
    %21 = vector.extract_strided_slice %19 {offsets = [0, 128], sizes = [256, 128], strides = [1, 1]} : vector<256x256xf32> to vector<256x128xf32>
    %22 = arith.maximumf %20, %21 : vector<256x128xf32>
    %c0_12 = arith.constant 0 : index
    %c0_13 = arith.constant 0 : index
    %23 = vector.load %arg3[%c0_12, %c0_13] : memref<1x128xf32, #tpu.memory_space<vmem>>, vector<1x128xf32>
    %24 = vector.broadcast %23 : vector<1x128xf32> to vector<256x128xf32>
    %25 = arith.addf %22, %24 : vector<256x128xf32>
    %cst_14 = arith.constant 0.000000e+00 : f32
    %26 = vector.broadcast %cst_14 : f32 to vector<256x128xf32>
    %27 = arith.maximumf %25, %26 : vector<256x128xf32>
    %28 = vector.shape_cast %27 : vector<256x128xf32> to vector<8x2x16x128xf32>
    %29 = vector.extract_strided_slice %28 {offsets = [0, 0, 0, 0], sizes = [8, 1, 16, 128], strides = [1, 1, 1, 1]} : vector<8x2x16x128xf32> to vector<8x1x16x128xf32>
    %30 = vector.shape_cast %29 : vector<8x1x16x128xf32> to vector<8x16x128xf32>
    %31 = vector.extract_strided_slice %28 {offsets = [0, 1, 0, 0], sizes = [8, 1, 16, 128], strides = [1, 1, 1, 1]} : vector<8x2x16x128xf32> to vector<8x1x16x128xf32>
    %32 = vector.shape_cast %31 : vector<8x1x16x128xf32> to vector<8x16x128xf32>
    %33 = arith.maximumf %30, %32 : vector<8x16x128xf32>
    %34 = arith.truncf %33 : vector<8x16x128xf32> to vector<8x16x128xbf16>
    %cst_15 = arith.constant 0.000000e+00 : bf16
    %35 = vector.broadcast %cst_15 : bf16 to vector<1x16x128xbf16>
    %36 = tpu.concatenate %35, %34, %35 in 0 : vector<1x16x128xbf16>, vector<8x16x128xbf16>, vector<1x16x128xbf16> -> vector<10x16x128xbf16>
    %37 = vector.extract_strided_slice %36 {offsets = [0, 0, 0], sizes = [8, 16, 128], strides = [1, 1, 1]} : vector<10x16x128xbf16> to vector<8x16x128xbf16>
    %38 = vector.shape_cast %37 : vector<8x16x128xbf16> to vector<128x128xbf16>
    %c0_16 = arith.constant 0 : index
    %c0_17 = arith.constant 0 : index
    %c0_18 = arith.constant 0 : index
    %39 = vector.load %arg4[%c0_16, %c0_17, %c0_18] : memref<3x128x128xbf16, #tpu.memory_space<vmem>>, vector<1x128x128xbf16>
    %40 = vector.shape_cast %39 : vector<1x128x128xbf16> to vector<128x128xbf16>
    %cst_19 = arith.constant dense<0.000000e+00> : vector<128x128xf32>
    %41 = tpu.matmul %38, %40, %cst_19 {dimension_numbers = #tpu.dot_dimension_numbers<[1], [0], [0], [1], [0, 0, 1, 1], [], []>} : vector<128x128xbf16>, vector<128x128xbf16>, vector<128x128xf32> -> vector<128x128xf32>
    %42 = vector.extract_strided_slice %36 {offsets = [1, 0, 0], sizes = [8, 16, 128], strides = [1, 1, 1]} : vector<10x16x128xbf16> to vector<8x16x128xbf16>
    %43 = vector.shape_cast %42 : vector<8x16x128xbf16> to vector<128x128xbf16>
    %c1_20 = arith.constant 1 : index
    %c0_21 = arith.constant 0 : index
    %c0_22 = arith.constant 0 : index
    %44 = vector.load %arg4[%c1_20, %c0_21, %c0_22] : memref<3x128x128xbf16, #tpu.memory_space<vmem>>, vector<1x128x128xbf16>
    %45 = vector.shape_cast %44 : vector<1x128x128xbf16> to vector<128x128xbf16>
    %cst_23 = arith.constant dense<0.000000e+00> : vector<128x128xf32>
    %46 = tpu.matmul %43, %45, %cst_23 {dimension_numbers = #tpu.dot_dimension_numbers<[1], [0], [0], [1], [0, 0, 1, 1], [], []>} : vector<128x128xbf16>, vector<128x128xbf16>, vector<128x128xf32> -> vector<128x128xf32>
    %47 = arith.addf %41, %46 : vector<128x128xf32>
    %48 = vector.extract_strided_slice %36 {offsets = [2, 0, 0], sizes = [8, 16, 128], strides = [1, 1, 1]} : vector<10x16x128xbf16> to vector<8x16x128xbf16>
    %49 = vector.shape_cast %48 : vector<8x16x128xbf16> to vector<128x128xbf16>
    %c2_24 = arith.constant 2 : index
    %c0_25 = arith.constant 0 : index
    %c0_26 = arith.constant 0 : index
    %50 = vector.load %arg4[%c2_24, %c0_25, %c0_26] : memref<3x128x128xbf16, #tpu.memory_space<vmem>>, vector<1x128x128xbf16>
    %51 = vector.shape_cast %50 : vector<1x128x128xbf16> to vector<128x128xbf16>
    %cst_27 = arith.constant dense<0.000000e+00> : vector<128x128xf32>
    %52 = tpu.matmul %49, %51, %cst_27 {dimension_numbers = #tpu.dot_dimension_numbers<[1], [0], [0], [1], [0, 0, 1, 1], [], []>} : vector<128x128xbf16>, vector<128x128xbf16>, vector<128x128xf32> -> vector<128x128xf32>
    %53 = arith.addf %47, %52 : vector<128x128xf32>
    %c0_28 = arith.constant 0 : index
    %c0_29 = arith.constant 0 : index
    %54 = vector.load %arg5[%c0_28, %c0_29] : memref<1x128xf32, #tpu.memory_space<vmem>>, vector<1x128xf32>
    %55 = vector.broadcast %54 : vector<1x128xf32> to vector<128x128xf32>
    %56 = arith.addf %53, %55 : vector<128x128xf32>
    %cst_30 = arith.constant 0.000000e+00 : f32
    %57 = vector.broadcast %cst_30 : f32 to vector<128x128xf32>
    %58 = arith.maximumf %56, %57 : vector<128x128xf32>
    %59 = vector.shape_cast %58 : vector<128x128xf32> to vector<4x2x16x128xf32>
    %60 = vector.extract_strided_slice %59 {offsets = [0, 0, 0, 0], sizes = [4, 1, 16, 128], strides = [1, 1, 1, 1]} : vector<4x2x16x128xf32> to vector<4x1x16x128xf32>
    %61 = vector.shape_cast %60 : vector<4x1x16x128xf32> to vector<4x16x128xf32>
    %62 = vector.extract_strided_slice %59 {offsets = [0, 1, 0, 0], sizes = [4, 1, 16, 128], strides = [1, 1, 1, 1]} : vector<4x2x16x128xf32> to vector<4x1x16x128xf32>
    %63 = vector.shape_cast %62 : vector<4x1x16x128xf32> to vector<4x16x128xf32>
    %64 = arith.maximumf %61, %63 : vector<4x16x128xf32>
    %c0_31 = arith.constant 0 : index
    %c0_32 = arith.constant 0 : index
    %c0_33 = arith.constant 0 : index
    %65 = vector.load %arg6[%c0_31, %c0_32, %c0_33] : memref<4x16x128xf32, #tpu.memory_space<vmem>>, vector<4x16x128xf32>
    tpu.vector_store %arg6[%c0_31, %c0_32, %c0_33], %64 {strides = array<i32>} : memref<4x16x128xf32, #tpu.memory_space<vmem>>, vector<4x16x128xf32>,
    return
  }
  func.func @transform_0(%arg0: i32) -> (i32, i32, i32) {
    %c0_i32 = arith.constant 0 : i32
    %c0_i32_0 = arith.constant 0 : i32
    %c0_i32_1 = arith.constant 0 : i32
    return %c0_i32, %arg0, %c0_i32_0 : i32, i32, i32
  }
  func.func @transform_1(%arg0: i32) -> (i32, i32, i32) {
    %c0_i32 = arith.constant 0 : i32
    %c0_i32_0 = arith.constant 0 : i32
    %c0_i32_1 = arith.constant 0 : i32
    %c0_i32_2 = arith.constant 0 : i32
    return %c0_i32, %c0_i32_0, %c0_i32_1 : i32, i32, i32
  }
  func.func @transform_2(%arg0: i32) -> (i32, i32) {
    %c0_i32 = arith.constant 0 : i32
    %c0_i32_0 = arith.constant 0 : i32
    %c0_i32_1 = arith.constant 0 : i32
    return %c0_i32, %c0_i32_0 : i32, i32
  }
  func.func @transform_3(%arg0: i32) -> (i32, i32, i32) {
    %c0_i32 = arith.constant 0 : i32
    %c0_i32_0 = arith.constant 0 : i32
    %c0_i32_1 = arith.constant 0 : i32
    %c0_i32_2 = arith.constant 0 : i32
    return %c0_i32, %c0_i32_0, %c0_i32_1 : i32, i32, i32
  }
  func.func @transform_4(%arg0: i32) -> (i32, i32) {
    %c0_i32 = arith.constant 0 : i32
    %c0_i32_0 = arith.constant 0 : i32
    %c0_i32_1 = arith.constant 0 : i32
    return %c0_i32, %c0_i32_0 : i32, i32
  }
  func.func @transform_5(%arg0: i32) -> (i32, i32, i32) {
    %c0_i32 = arith.constant 0 : i32
    %c0_i32_0 = arith.constant 0 : i32
    %c0_i32_1 = arith.constant 0 : i32
    return %c0_i32, %arg0, %c0_i32_0 : i32, i32, i32
  }
}

</mosaic_0001>

<llo_original>
// kernel: _forward_impl.1
$region0: #{_forward_impl.1}
  #allocation0 [shape = 'u32[]', space=smem, size = 0x4, offset = 0x4, fixed_abs, tag = 'smem constant byte address 0x4 - core index']
  #allocation1 [shape = 'u32[144,128]{1,0:T(1,128)}', space=vmem, size = 0x12000, scoped, tag = 'internal scratch']
  %s0 = inlined_call_operand.vmem [shape: bf16[16,16,48], index: 0, kind: input, shape index: {}]
  %s1 = inlined_call_operand.vmem [shape: bf16[3,48,256], index: 1, kind: input, shape index: {}]
  %s2 = inlined_call_operand.vmem [shape: f32[1,128], index: 2, kind: input, shape index: {}]
  %s3 = inlined_call_operand.vmem [shape: bf16[3,128,128], index: 3, kind: input, shape index: {}]
  %s4 = inlined_call_operand.vmem [shape: f32[1,128], index: 4, kind: input, shape index: {}]
  %s5 = inlined_call_operand.vmem [shape: f32[4,16,128], index: 5, kind: output, shape index: {}]
  %s6 = sld [smem:[#allocation0]]
  $region30: #{_forward_impl.1} parent=0
    _
  %s8 = ssub.s32 1, %s6
  %s9 = scalar_select 0, %s8, %s6
  // Predicated region
  $region2: #{_forward_impl.1} parent=0 // pred_check
    _
  $region3: #{_forward_impl.1} parent=0 // pred_check_branch
    %11 = sbr.rel (0) target = $region5
  $region4: #{_forward_impl.1} parent=0 // pred_region
    _
  $region5: #{_forward_impl.1} parent=0 // pred_fallthru
    _
  // Predicated region
  $region6: #{_forward_impl.1} parent=0 // pred_check
    _
  $region7: #{_forward_impl.1} parent=0 // pred_check_branch
    %13 = sbr.rel (0) target = $region9
  $region8: #{_forward_impl.1} parent=0 // pred_region
    _
  $region9: #{_forward_impl.1} parent=0 // pred_fallthru
    _
  // Predicated region
  $region10: #{_forward_impl.1} parent=0 // pred_check
    _
  $region11: #{_forward_impl.1} parent=0 // pred_check_branch
    %15 = sbr.rel (0) target = $region13
  $region12: #{_forward_impl.1} parent=0 // pred_region
    _
  $region13: #{_forward_impl.1} parent=0 // pred_fallthru
    _
  // Predicated region
  $region14: #{_forward_impl.1} parent=0 // pred_check
    _
  $region15: #{_forward_impl.1} parent=0 // pred_check_branch
    %17 = sbr.rel (0) target = $region17
  $region16: #{_forward_impl.1} parent=0 // pred_region
    _
  $region17: #{_forward_impl.1} parent=0 // pred_fallthru
    _
  // Predicated region
  $region18: #{_forward_impl.1} parent=0 // pred_check
    _
  $region19: #{_forward_impl.1} parent=0 // pred_check_branch
    %19 = sbr.rel (0) target = $region21
  $region20: #{_forward_impl.1} parent=0 // pred_region
    _
  $region21: #{_forward_impl.1} parent=0 // pred_fallthru
    _
  %v21 = vld [vmem:[%s0] sm:$0xf]
  %v22 = vld [vmem:[%s0 + $0x4] sm:$0xf]
  %v23 = vld [vmem:[%s0 + $0x8] sm:$0xf]
  %v24 = vld [vmem:[%s0 + $0xc] sm:$0xf]
  %v25 = vld [vmem:[%s0 + $0x10] sm:$0xf]
  %v26 = vld [vmem:[%s0 + $0x14] sm:$0xf]
  %v27 = vld [vmem:[%s0 + $0x18] sm:$0xf]
  %v28 = vld [vmem:[%s0 + $0x1c] sm:$0xf]
  %v29 = vld [vmem:[%s0 + $0x20] sm:$0xf]
  %v30 = vld [vmem:[%s0 + $0x24] sm:$0xf]
  %v31 = vld [vmem:[%s0 + $0x28] sm:$0xf]
  %v32 = vld [vmem:[%s0 + $0x2c] sm:$0xf]
  %v33 = vld [vmem:[%s0 + $0x30] sm:$0xf]
  %v34 = vld [vmem:[%s0 + $0x34] sm:$0xf]
  %v35 = vld [vmem:[%s0 + $0x38] sm:$0xf]
  %v36 = vld [vmem:[%s0 + $0x3c] sm:$0xf]
  %v37 = vld [vmem:[%s0 + $0x40] sm:$0xf]
  %v38 = vld [vmem:[%s0 + $0x44] sm:$0xf]
  %v39 = vld [vmem:[%s0 + $0x48] sm:$0xf]
  %v40 = vld [vmem:[%s0 + $0x4c] sm:$0xf]
  %v41 = vld [vmem:[%s0 + $0x50] sm:$0xf]
  %v42 = vld [vmem:[%s0 + $0x54] sm:$0xf]
  %v43 = vld [vmem:[%s0 + $0x58] sm:$0xf]
  %v44 = vld [vmem:[%s0 + $0x5c] sm:$0xf]
  %v45 = vld [vmem:[%s0 + $0x60] sm:$0xf]
  %v46 = vld [vmem:[%s0 + $0x64] sm:$0xf]
  %v47 = vld [vmem:[%s0 + $0x68] sm:$0xf]
  %v48 = vld [vmem:[%s0 + $0x6c] sm:$0xf]
  %v49 = vld [vmem:[%s0 + $0x70] sm:$0xf]
  %v50 = vld [vmem:[%s0 + $0x74] sm:$0xf]
  %v51 = vld [vmem:[%s0 + $0x78] sm:$0xf]
  %v52 = vld [vmem:[%s0 + $0x7c] sm:$0xf]
  %v85 = vunpack.c.l.b16 %v21
  %v86 = vunpack.c.l.b16 %v22
  %v87 = vunpack.c.l.b16 %v23
  %v88 = vunpack.c.l.b16 %v24
  %v89 = vunpack.c.l.b16 %v25
  %v90 = vunpack.c.l.b16 %v26
  %v91 = vunpack.c.l.b16 %v27
  %v92 = vunpack.c.l.b16 %v28
  %v93 = vunpack.c.l.b16 %v29
  %v94 = vunpack.c.l.b16 %v30
  %v95 = vunpack.c.l.b16 %v31
  %v96 = vunpack.c.l.b16 %v32
  %v97 = vunpack.c.l.b16 %v33
  %v98 = vunpack.c.l.b16 %v34
  %v99 = vunpack.c.l.b16 %v35
  %v100 = vunpack.c.l.b16 %v36
  %v101 = vunpack.c.l.b16 %v37
  %v102 = vunpack.c.l.b16 %v38
  %v103 = vunpack.c.l.b16 %v39
  %v104 = vunpack.c.l.b16 %v40
  %v105 = vunpack.c.l.b16 %v41
  %v106 = vunpack.c.l.b16 %v42
  %v107 = vunpack.c.l.b16 %v43
  %v108 = vunpack.c.l.b16 %v44
  %v109 = vunpack.c.l.b16 %v45
  %v110 = vunpack.c.l.b16 %v46
  %v111 = vunpack.c.l.b16 %v47
  %v112 = vunpack.c.l.b16 %v48
  %v113 = vunpack.c.l.b16 %v49
  %v114 = vunpack.c.l.b16 %v50
  %v115 = vunpack.c.l.b16 %v51
  %v116 = vunpack.c.l.b16 %v52
  %v117 = vpack.c.b16 %v86, %v85
  %v118 = vpack.c.b16 %v88, %v87
  %v119 = vpack.c.b16 %v90, %v89
  %v120 = vpack.c.b16 %v92, %v91
  %v121 = vpack.c.b16 %v94, %v93
  %v122 = vpack.c.b16 %v96, %v95
  %v123 = vpack.c.b16 %v98, %v97
  %v124 = vpack.c.b16 %v100, %v99
  %v125 = vpack.c.b16 %v102, %v101
  %v126 = vpack.c.b16 %v104, %v103
  %v127 = vpack.c.b16 %v106, %v105
  %v128 = vpack.c.b16 %v108, %v107
  %v129 = vpack.c.b16 %v110, %v109
  %v130 = vpack.c.b16 %v112, %v111
  %v131 = vpack.c.b16 %v114, %v113
  %v132 = vpack.c.b16 %v116, %v115
  %v133 = vld [vmem:[%s1] sm:$0xff]
  %v134 = vld [vmem:[%s1 + $0x8] sm:$0xff]
  %v135 = vld [vmem:[%s1 + $0x10] sm:$0xff]
  %v136 = vld [vmem:[%s1 + $0x18] sm:$0xff]
  %v137 = vld [vmem:[%s1 + $0x20] sm:$0xff]
  %v138 = vld [vmem:[%s1 + $0x28] sm:$0xff]
  %s139 = scalar_lea.vmem %s1, 48
  %v140 = vld [vmem:[%s139] sm:$0xff]
  %v141 = vld [vmem:[%s139 + $0x8] sm:$0xff]
  %v142 = vld [vmem:[%s139 + $0x10] sm:$0xff]
  %v143 = vld [vmem:[%s139 + $0x18] sm:$0xff]
  %v144 = vld [vmem:[%s139 + $0x20] sm:$0xff]
  %v145 = vld [vmem:[%s139 + $0x28] sm:$0xff]
  %v152 = vunpack.c.l.b16 %v140
  %v153 = vunpack.c.h.b16 %v140
  %v154 = vunpack.c.l.b16 %v141
  %v155 = vunpack.c.h.b16 %v141
  %v156 = vunpack.c.l.b16 %v142
  %v157 = vunpack.c.h.b16 %v142
  %v158 = vunpack.c.l.b16 %v143
  %v159 = vunpack.c.h.b16 %v143
  %v160 = vunpack.c.l.b16 %v144
  %v161 = vunpack.c.h.b16 %v144
  %v162 = vunpack.c.l.b16 %v145
  %v163 = vunpack.c.h.b16 %v145
  %v164 = vpack.c.b16 %v154, %v152
  %v165 = vpack.c.b16 %v155, %v153
  %v166 = vpack.c.b16 %v158, %v156
  %v167 = vpack.c.b16 %v159, %v157
  %v168 = vpack.c.b16 %v162, %v160
  %v169 = vpack.c.b16 %v163, %v161
  %vm176 = vcmask 392192
  %v178 = vsel %vm176, %v117, 0
  %v181 = vsel %vm176, %v118, 0
  %v184 = vsel %vm176, %v119, 0
  %v187 = vsel %vm176, %v120, 0
  %v190 = vsel %vm176, %v121, 0
  %v193 = vsel %vm176, %v122, 0
  %v196 = vsel %vm176, %v123, 0
  %v199 = vsel %vm176, %v124, 0
  %v202 = vsel %vm176, %v125, 0
  %v205 = vsel %vm176, %v126, 0
  %v208 = vsel %vm176, %v127, 0
  %v211 = vsel %vm176, %v128, 0
  %v214 = vsel %vm176, %v129, 0
  %v217 = vsel %vm176, %v130, 0
  %v220 = vsel %vm176, %v131, 0
  %v223 = vsel %vm176, %v132, 0
  %225 = vmatprep.subr.bf16.mxu0 %v165
  %226 = vmatpush1.bf16.msra.mxu0 %v164
  %227 = vmatprep.subr.bf16.mxu0 %v167
  %228 = vmatpush1.bf16.msra.mxu0 %v166
  %229 = vmatprep.subr.bf16.mxu0 %v169
  %230 = vmatpush1.bf16.msra.mxu0 %v168
  %231 = vmatprep.subr.bf16.mxu0 0
  %232 = vmatpush1.bf16.msra.mxu0 0
  %233 = vmatprep.subr.bf16.mxu0 0
  %234 = vmatpush1.bf16.msra.mxu0 0
  %235 = vmatprep.subr.bf16.mxu0 0
  %236 = vmatpush1.bf16.msra.mxu0 0
  %237 = vmatprep.subr.bf16.mxu0 0
  %238 = vmatpush1.bf16.msra.mxu0 0
  %239 = vmatprep.subr.bf16.mxu0 0
  %240 = vmatpush1.bf16.msra.mxu0 0
  %241 = vmatprep.subr.bf16.mxu0 0
  %242 = vmatpush1.bf16.msra.mxu0 0
  %243 = vmatprep.subr.bf16.mxu0 0
  %244 = vmatpush1.bf16.msra.mxu0 0
  %245 = vmatprep.subr.bf16.mxu0 0
  %246 = vmatpush1.bf16.msra.mxu0 0
  %247 = vmatprep.subr.bf16.mxu0 0
  %248 = vmatpush1.bf16.msra.mxu0 0
  %249 = vmatprep.subr.bf16.mxu0 0
  %250 = vmatpush1.bf16.msra.mxu0 0
  %251 = vmatprep.subr.bf16.mxu0 0
  %252 = vmatpush1.bf16.msra.mxu0 0
  %253 = vmatprep.subr.bf16.mxu0 0
  %254 = vmatpush1.bf16.msra.mxu0 0
  %255 = vmatprep.subr.bf16.mxu0 0
  %256 = vmatpush1.bf16.msra.mxu0 0
  %257 = vmatprep.mubr.bf16.mxu0 0
  %258 = vmatmul.mubr.bf16.gmra.mrb[0].mxu0 %v178
  %v259 = vpop.f32.mrb[0].mxu0
  %v260 = vadd.f32 0.0, %v259
  %v261 = vpop.f32.mrb[0].mxu0
  %v262 = vadd.f32 0.0, %v261
  %v263 = vpop.f32.mrb[0].mxu0
  %v264 = vadd.f32 0.0, %v263
  %v265 = vpop.f32.mrb[0].mxu0
  %v266 = vadd.f32 0.0, %v265
  %267 = vmatprep.mubr.bf16.mxu0 0
  %268 = vmatmul.mubr.bf16.gmra.mrb[0].mxu0 %v181
  %v269 = vpop.f32.mrb[0].mxu0
  %v270 = vadd.f32 0.0, %v269
  %v271 = vpop.f32.mrb[0].mxu0
  %v272 = vadd.f32 0.0, %v271
  %v273 = vpop.f32.mrb[0].mxu0
  %v274 = vadd.f32 0.0, %v273
  %v275 = vpop.f32.mrb[0].mxu0
  %v276 = vadd.f32 0.0, %v275
  %277 = vmatprep.mubr.bf16.mxu0 0
  %278 = vmatmul.mubr.bf16.gmra.mrb[0].mxu0 %v184
  %v279 = vpop.f32.mrb[0].mxu0
  %v280 = vadd.f32 0.0, %v279
  %v281 = vpop.f32.mrb[0].mxu0
  %v282 = vadd.f32 0.0, %v281
  %v283 = vpop.f32.mrb[0].mxu0
  %v284 = vadd.f32 0.0, %v283
  %v285 = vpop.f32.mrb[0].mxu0
  %v286 = vadd.f32 0.0, %v285
  %287 = vmatprep.mubr.bf16.mxu0 0
  %288 = vmatmul.mubr.bf16.gmra.mrb[0].mxu0 %v187
  %v289 = vpop.f32.mrb[0].mxu0
  %v290 = vadd.f32 0.0, %v289
  %v291 = vpop.f32.mrb[0].mxu0
  %v292 = vadd.f32 0.0, %v291
  %v293 = vpop.f32.mrb[0].mxu0
  %v294 = vadd.f32 0.0, %v293
  %v295 = vpop.f32.mrb[0].mxu0
  %v296 = vadd.f32 0.0, %v295
  %297 = vmatprep.mubr.bf16.mxu0 0
  %298 = vmatmul.mubr.bf16.gmra.mrb[0].mxu0 %v190
  %v299 = vpop.f32.mrb[0].mxu0
  %v300 = vadd.f32 0.0, %v299
  %v301 = vpop.f32.mrb[0].mxu0
  %v302 = vadd.f32 0.0, %v301
  %v303 = vpop.f32.mrb[0].mxu0
  %v304 = vadd.f32 0.0, %v303
  %v305 = vpop.f32.mrb[0].mxu0
  %v306 = vadd.f32 0.0, %v305
  %307 = vmatprep.mubr.bf16.mxu0 0
  %308 = vmatmul.mubr.bf16.gmra.mrb[0].mxu0 %v193
  %v309 = vpop.f32.mrb[0].mxu0
  %v310 = vadd.f32 0.0, %v309
  %v311 = vpop.f32.mrb[0].mxu0
  %v312 = vadd.f32 0.0, %v311
  %v313 = vpop.f32.mrb[0].mxu0
  %v314 = vadd.f32 0.0, %v313
  %v315 = vpop.f32.mrb[0].mxu0
  %v316 = vadd.f32 0.0, %v315
  %317 = vmatprep.mubr.bf16.mxu0 0
  %318 = vmatmul.mubr.bf16.gmra.mrb[0].mxu0 %v196
  %v319 = vpop.f32.mrb[0].mxu0
  %v320 = vadd.f32 0.0, %v319
  %v321 = vpop.f32.mrb[0].mxu0
  %v322 = vadd.f32 0.0, %v321
  %v323 = vpop.f32.mrb[0].mxu0
  %v324 = vadd.f32 0.0, %v323
  %v325 = vpop.f32.mrb[0].mxu0
  %v326 = vadd.f32 0.0, %v325
  %327 = vmatprep.mubr.bf16.mxu0 0
  %328 = vmatmul.mubr.bf16.gmra.mrb[0].mxu0 %v199
  %v329 = vpop.f32.mrb[0].mxu0
  %v330 = vadd.f32 0.0, %v329
  %v331 = vpop.f32.mrb[0].mxu0
  %v332 = vadd.f32 0.0, %v331
  %v333 = vpop.f32.mrb[0].mxu0
  %v334 = vadd.f32 0.0, %v333
  %v335 = vpop.f32.mrb[0].mxu0
  %v336 = vadd.f32 0.0, %v335
  %337 = vmatprep.mubr.bf16.mxu0 0
  %338 = vmatmul.mubr.bf16.gmra.mrb[0].mxu0 %v202
  %v339 = vpop.f32.mrb[0].mxu0
  %v340 = vadd.f32 0.0, %v339
  %v341 = vpop.f32.mrb[0].mxu0
  %v342 = vadd.f32 0.0, %v341
  %v343 = vpop.f32.mrb[0].mxu0
  %v344 = vadd.f32 0.0, %v343
  %v345 = vpop.f32.mrb[0].mxu0
  %v346 = vadd.f32 0.0, %v345
  %347 = vmatprep.mubr.bf16.mxu0 0
  %348 = vmatmul.mubr.bf16.gmra.mrb[0].mxu0 %v205
  %v349 = vpop.f32.mrb[0].mxu0
  %v350 = vadd.f32 0.0, %v349
  %v351 = vpop.f32.mrb[0].mxu0
  %v352 = vadd.f32 0.0, %v351
  %v353 = vpop.f32.mrb[0].mxu0
  %v354 = vadd.f32 0.0, %v353
  %v355 = vpop.f32.mrb[0].mxu0
  %v356 = vadd.f32 0.0, %v355
  %357 = vmatprep.mubr.bf16.mxu0 0
  %358 = vmatmul.mubr.bf16.gmra.mrb[0].mxu0 %v208
  %v359 = vpop.f32.mrb[0].mxu0
  %v360 = vadd.f32 0.0, %v359
  %v361 = vpop.f32.mrb[0].mxu0
  %v362 = vadd.f32 0.0, %v361
  %v363 = vpop.f32.mrb[0].mxu0
  %v364 = vadd.f32 0.0, %v363
  %v365 = vpop.f32.mrb[0].mxu0
  %v366 = vadd.f32 0.0, %v365
  %367 = vmatprep.mubr.bf16.mxu0 0
  %368 = vmatmul.mubr.bf16.gmra.mrb[0].mxu0 %v211
  %v369 = vpop.f32.mrb[0].mxu0
  %v370 = vadd.f32 0.0, %v369
  %v371 = vpop.f32.mrb[0].mxu0
  %v372 = vadd.f32 0.0, %v371
  %v373 = vpop.f32.mrb[0].mxu0
  %v374 = vadd.f32 0.0, %v373
  %v375 = vpop.f32.mrb[0].mxu0
  %v376 = vadd.f32 0.0, %v375
  %377 = vmatprep.mubr.bf16.mxu0 0
  %378 = vmatmul.mubr.bf16.gmra.mrb[0].mxu0 %v214
  %v379 = vpop.f32.mrb[0].mxu0
  %v380 = vadd.f32 0.0, %v379
  %v381 = vpop.f32.mrb[0].mxu0
  %v382 = vadd.f32 0.0, %v381
  %v383 = vpop.f32.mrb[0].mxu0
  %v384 = vadd.f32 0.0, %v383
  %v385 = vpop.f32.mrb[0].mxu0
  %v386 = vadd.f32 0.0, %v385
  %387 = vmatprep.mubr.bf16.mxu0 0
  %388 = vmatmul.mubr.bf16.gmra.mrb[0].mxu0 %v217
  %v389 = vpop.f32.mrb[0].mxu0
  %v390 = vadd.f32 0.0, %v389
  %v391 = vpop.f32.mrb[0].mxu0
  %v392 = vadd.f32 0.0, %v391
  %v393 = vpop.f32.mrb[0].mxu0
  %v394 = vadd.f32 0.0, %v393
  %v395 = vpop.f32.mrb[0].mxu0
  %v396 = vadd.f32 0.0, %v395
  %397 = vmatprep.mubr.bf16.mxu0 0
  %398 = vmatmul.mubr.bf16.gmra.mrb[0].mxu0 %v220
  %v399 = vpop.f32.mrb[0].mxu0
  %v400 = vadd.f32 0.0, %v399
  %v401 = vpop.f32.mrb[0].mxu0
  %v402 = vadd.f32 0.0, %v401
  %v403 = vpop.f32.mrb[0].mxu0
  %v404 = vadd.f32 0.0, %v403
  %v405 = vpop.f32.mrb[0].mxu0
  %v406 = vadd.f32 0.0, %v405
  %407 = vmatprep.mubr.bf16.mxu0 0
  %408 = vmatmul.mubr.bf16.gmra.mrb[0].mxu0 %v223
  %v409 = vpop.f32.mrb[0].mxu0
  %v410 = vadd.f32 0.0, %v409
  %v411 = vpop.f32.mrb[0].mxu0
  %v412 = vadd.f32 0.0, %v411
  %v413 = vpop.f32.mrb[0].mxu0
  %v414 = vadd.f32 0.0, %v413
  %v415 = vpop.f32.mrb[0].mxu0
  %v416 = vadd.f32 0.0, %v415
  %417 = vdwg.mxu0
  %v424 = vunpack.c.l.b16 %v133
  %v425 = vunpack.c.h.b16 %v133
  %v426 = vunpack.c.l.b16 %v134
  %v427 = vunpack.c.h.b16 %v134
  %v428 = vunpack.c.l.b16 %v135
  %v429 = vunpack.c.h.b16 %v135
  %v430 = vunpack.c.l.b16 %v136
  %v431 = vunpack.c.h.b16 %v136
  %v432 = vunpack.c.l.b16 %v137
  %v433 = vunpack.c.h.b16 %v137
  %v434 = vunpack.c.l.b16 %v138
  %v435 = vunpack.c.h.b16 %v138
  %v436 = vpack.c.b16 %v426, %v424
  %v437 = vpack.c.b16 %v427, %v425
  %v438 = vpack.c.b16 %v430, %v428
  %v439 = vpack.c.b16 %v431, %v429
  %v440 = vpack.c.b16 %v434, %v432
  %v441 = vpack.c.b16 %v435, %v433
  %v449 = vsel %vm176, 0, 0
  %451 = vmatprep.subr.bf16.mxu0 %v437
  %452 = vmatpush1.bf16.msra.mxu0 %v436
  %453 = vmatprep.subr.bf16.mxu0 %v439
  %454 = vmatpush1.bf16.msra.mxu0 %v438
  %455 = vmatprep.subr.bf16.mxu0 %v441
  %456 = vmatpush1.bf16.msra.mxu0 %v440
  %457 = vmatprep.subr.bf16.mxu0 0
  %458 = vmatpush1.bf16.msra.mxu0 0
  %459 = vmatprep.subr.bf16.mxu0 0
  %460 = vmatpush1.bf16.msra.mxu0 0
  %461 = vmatprep.subr.bf16.mxu0 0
  %462 = vmatpush1.bf16.msra.mxu0 0
  %463 = vmatprep.subr.bf16.mxu0 0
  %464 = vmatpush1.bf16.msra.mxu0 0
  %465 = vmatprep.subr.bf16.mxu0 0
  %466 = vmatpush1.bf16.msra.mxu0 0
  %467 = vmatprep.subr.bf16.mxu0 0
  %468 = vmatpush1.bf16.msra.mxu0 0
  %469 = vmatprep.subr.bf16.mxu0 0
  %470 = vmatpush1.bf16.msra.mxu0 0
  %471 = vmatprep.subr.bf16.mxu0 0
  %472 = vmatpush1.bf16.msra.mxu0 0
  %473 = vmatprep.subr.bf16.mxu0 0
  %474 = vmatpush1.bf16.msra.mxu0 0
  %475 = vmatprep.subr.bf16.mxu0 0
  %476 = vmatpush1.bf16.msra.mxu0 0
  %477 = vmatprep.subr.bf16.mxu0 0
  %478 = vmatpush1.bf16.msra.mxu0 0
  %479 = vmatprep.subr.bf16.mxu0 0
  %480 = vmatpush1.bf16.msra.mxu0 0
  %481 = vmatprep.subr.bf16.mxu0 0
  %482 = vmatpush1.bf16.msra.mxu0 0
  %483 = vmatprep.mubr.bf16.mxu0 0
  %484 = vmatmul.mubr.bf16.gmra.mrb[0].mxu0 %v449
  %v485 = vpop.f32.mrb[0].mxu0
  %v486 = vadd.f32 %v260, %v485
  %v487 = vpop.f32.mrb[0].mxu0
  %v488 = vadd.f32 %v262, %v487
  %v489 = vpop.f32.mrb[0].mxu0
  %v490 = vadd.f32 %v264, %v489
  %v491 = vpop.f32.mrb[0].mxu0
  %v492 = vadd.f32 %v266, %v491
  %493 = vmatprep.mubr.bf16.mxu0 0
  %494 = vmatmul.mubr.bf16.gmra.mrb[0].mxu0 %v178
  %v495 = vpop.f32.mrb[0].mxu0
  %v496 = vadd.f32 %v270, %v495
  %v497 = vpop.f32.mrb[0].mxu0
  %v498 = vadd.f32 %v272, %v497
  %v499 = vpop.f32.mrb[0].mxu0
  %v500 = vadd.f32 %v274, %v499
  %v501 = vpop.f32.mrb[0].mxu0
  %v502 = vadd.f32 %v276, %v501
  %503 = vmatprep.mubr.bf16.mxu0 0
  %504 = vmatmul.mubr.bf16.gmra.mrb[0].mxu0 %v181
  %v505 = vpop.f32.mrb[0].mxu0
  %v506 = vadd.f32 %v280, %v505
  %v507 = vpop.f32.mrb[0].mxu0
  %v508 = vadd.f32 %v282, %v507
  %v509 = vpop.f32.mrb[0].mxu0
  %v510 = vadd.f32 %v284, %v509
  %v511 = vpop.f32.mrb[0].mxu0
  %v512 = vadd.f32 %v286, %v511
  %513 = vmatprep.mubr.bf16.mxu0 0
  %514 = vmatmul.mubr.bf16.gmra.mrb[0].mxu0 %v184
  %v515 = vpop.f32.mrb[0].mxu0
  %v516 = vadd.f32 %v290, %v515
  %v517 = vpop.f32.mrb[0].mxu0
  %v518 = vadd.f32 %v292, %v517
  %v519 = vpop.f32.mrb[0].mxu0
  %v520 = vadd.f32 %v294, %v519
  %v521 = vpop.f32.mrb[0].mxu0
  %v522 = vadd.f32 %v296, %v521
  %523 = vmatprep.mubr.bf16.mxu0 0
  %524 = vmatmul.mubr.bf16.gmra.mrb[0].mxu0 %v187
  %v525 = vpop.f32.mrb[0].mxu0
  %v526 = vadd.f32 %v300, %v525
  %v527 = vpop.f32.mrb[0].mxu0
  %v528 = vadd.f32 %v302, %v527
  %v529 = vpop.f32.mrb[0].mxu0
  %v530 = vadd.f32 %v304, %v529
  %v531 = vpop.f32.mrb[0].mxu0
  %v532 = vadd.f32 %v306, %v531
  %533 = vmatprep.mubr.bf16.mxu0 0
  %534 = vmatmul.mubr.bf16.gmra.mrb[0].mxu0 %v190
  %v535 = vpop.f32.mrb[0].mxu0
  %v536 = vadd.f32 %v310, %v535
  %v537 = vpop.f32.mrb[0].mxu0
  %v538 = vadd.f32 %v312, %v537
  %v539 = vpop.f32.mrb[0].mxu0
  %v540 = vadd.f32 %v314, %v539
  %v541 = vpop.f32.mrb[0].mxu0
  %v542 = vadd.f32 %v316, %v541
  %543 = vmatprep.mubr.bf16.mxu0 0
  %544 = vmatmul.mubr.bf16.gmra.mrb[0].mxu0 %v193
  %v545 = vpop.f32.mrb[0].mxu0
  %v546 = vadd.f32 %v320, %v545
  %v547 = vpop.f32.mrb[0].mxu0
  %v548 = vadd.f32 %v322, %v547
  %v549 = vpop.f32.mrb[0].mxu0
  %v550 = vadd.f32 %v324, %v549
  %v551 = vpop.f32.mrb[0].mxu0
  %v552 = vadd.f32 %v326, %v551
  %553 = vmatprep.mubr.bf16.mxu0 0
  %554 = vmatmul.mubr.bf16.gmra.mrb[0].mxu0 %v196
  %v555 = vpop.f32.mrb[0].mxu0
  %v556 = vadd.f32 %v330, %v555
  %v557 = vpop.f32.mrb[0].mxu0
  %v558 = vadd.f32 %v332, %v557
  %v559 = vpop.f32.mrb[0].mxu0
  %v560 = vadd.f32 %v334, %v559
  %v561 = vpop.f32.mrb[0].mxu0
  %v562 = vadd.f32 %v336, %v561
  %563 = vmatprep.mubr.bf16.mxu0 0
  %564 = vmatmul.mubr.bf16.gmra.mrb[0].mxu0 %v199
  %v565 = vpop.f32.mrb[0].mxu0
  %v566 = vadd.f32 %v340, %v565
  %v567 = vpop.f32.mrb[0].mxu0
  %v568 = vadd.f32 %v342, %v567
  %v569 = vpop.f32.mrb[0].mxu0
  %v570 = vadd.f32 %v344, %v569
  %v571 = vpop.f32.mrb[0].mxu0
  %v572 = vadd.f32 %v346, %v571
  %573 = vmatprep.mubr.bf16.mxu0 0
  %574 = vmatmul.mubr.bf16.gmra.mrb[0].mxu0 %v202
  %v575 = vpop.f32.mrb[0].mxu0
  %v576 = vadd.f32 %v350, %v575
  %v577 = vpop.f32.mrb[0].mxu0
  %v578 = vadd.f32 %v352, %v577
  %v579 = vpop.f32.mrb[0].mxu0
  %v580 = vadd.f32 %v354, %v579
  %v581 = vpop.f32.mrb[0].mxu0
  %v582 = vadd.f32 %v356, %v581
  %583 = vmatprep.mubr.bf16.mxu0 0
  %584 = vmatmul.mubr.bf16.gmra.mrb[0].mxu0 %v205
  %v585 = vpop.f32.mrb[0].mxu0
  %v586 = vadd.f32 %v360, %v585
  %v587 = vpop.f32.mrb[0].mxu0
  %v588 = vadd.f32 %v362, %v587
  %v589 = vpop.f32.mrb[0].mxu0
  %v590 = vadd.f32 %v364, %v589
  %v591 = vpop.f32.mrb[0].mxu0
  %v592 = vadd.f32 %v366, %v591
  %593 = vmatprep.mubr.bf16.mxu0 0
  %594 = vmatmul.mubr.bf16.gmra.mrb[0].mxu0 %v208
  %v595 = vpop.f32.mrb[0].mxu0
  %v596 = vadd.f32 %v370, %v595
  %v597 = vpop.f32.mrb[0].mxu0
  %v598 = vadd.f32 %v372, %v597
  %v599 = vpop.f32.mrb[0].mxu0
  %v600 = vadd.f32 %v374, %v599
  %v601 = vpop.f32.mrb[0].mxu0
  %v602 = vadd.f32 %v376, %v601
  %603 = vmatprep.mubr.bf16.mxu0 0
  %604 = vmatmul.mubr.bf16.gmra.mrb[0].mxu0 %v211
  %v605 = vpop.f32.mrb[0].mxu0
  %v606 = vadd.f32 %v380, %v605
  %v607 = vpop.f32.mrb[0].mxu0
  %v608 = vadd.f32 %v382, %v607
  %v609 = vpop.f32.mrb[0].mxu0
  %v610 = vadd.f32 %v384, %v609
  %v611 = vpop.f32.mrb[0].mxu0
  %v612 = vadd.f32 %v386, %v611
  %613 = vmatprep.mubr.bf16.mxu0 0
  %614 = vmatmul.mubr.bf16.gmra.mrb[0].mxu0 %v214
  %v615 = vpop.f32.mrb[0].mxu0
  %v616 = vadd.f32 %v390, %v615
  %v617 = vpop.f32.mrb[0].mxu0
  %v618 = vadd.f32 %v392, %v617
  %v619 = vpop.f32.mrb[0].mxu0
  %v620 = vadd.f32 %v394, %v619
  %v621 = vpop.f32.mrb[0].mxu0
  %v622 = vadd.f32 %v396, %v621
  %623 = vmatprep.mubr.bf16.mxu0 0
  %624 = vmatmul.mubr.bf16.gmra.mrb[0].mxu0 %v217
  %v625 = vpop.f32.mrb[0].mxu0
  %v626 = vadd.f32 %v400, %v625
  %v627 = vpop.f32.mrb[0].mxu0
  %v628 = vadd.f32 %v402, %v627
  %v629 = vpop.f32.mrb[0].mxu0
  %v630 = vadd.f32 %v404, %v629
  %v631 = vpop.f32.mrb[0].mxu0
  %v632 = vadd.f32 %v406, %v631
  %633 = vmatprep.mubr.bf16.mxu0 0
  %634 = vmatmul.mubr.bf16.gmra.mrb[0].mxu0 %v220
  %v635 = vpop.f32.mrb[0].mxu0
  %v636 = vadd.f32 %v410, %v635
  %v637 = vpop.f32.mrb[0].mxu0
  %v638 = vadd.f32 %v412, %v637
  %v639 = vpop.f32.mrb[0].mxu0
  %v640 = vadd.f32 %v414, %v639
  %v641 = vpop.f32.mrb[0].mxu0
  %v642 = vadd.f32 %v416, %v641
  %643 = vdwg.mxu0
  %s644 = scalar_lea.vmem %s1, 96
  %v645 = vld [vmem:[%s644] sm:$0xff]
  %v646 = vld [vmem:[%s644 + $0x8] sm:$0xff]
  %v647 = vld [vmem:[%s644 + $0x10] sm:$0xff]
  %v648 = vld [vmem:[%s644 + $0x18] sm:$0xff]
  %v649 = vld [vmem:[%s644 + $0x20] sm:$0xff]
  %v650 = vld [vmem:[%s644 + $0x28] sm:$0xff]
  %v657 = vunpack.c.l.b16 %v645
  %v658 = vunpack.c.h.b16 %v645
  %v659 = vunpack.c.l.b16 %v646
  %v660 = vunpack.c.h.b16 %v646
  %v661 = vunpack.c.l.b16 %v647
  %v662 = vunpack.c.h.b16 %v647
  %v663 = vunpack.c.l.b16 %v648
  %v664 = vunpack.c.h.b16 %v648
  %v665 = vunpack.c.l.b16 %v649
  %v666 = vunpack.c.h.b16 %v649
  %v667 = vunpack.c.l.b16 %v650
  %v668 = vunpack.c.h.b16 %v650
  %v669 = vpack.c.b16 %v659, %v657
  %v670 = vpack.c.b16 %v660, %v658
  %v671 = vpack.c.b16 %v663, %v661
  %v672 = vpack.c.b16 %v664, %v662
  %v673 = vpack.c.b16 %v667, %v665
  %v674 = vpack.c.b16 %v668, %v666
  %681 = vmatprep.subr.bf16.mxu0 %v670
  %682 = vmatpush1.bf16.msra.mxu0 %v669
  %683 = vmatprep.subr.bf16.mxu0 %v672
  %684 = vmatpush1.bf16.msra.mxu0 %v671
  %685 = vmatprep.subr.bf16.mxu0 %v674
  %686 = vmatpush1.bf16.msra.mxu0 %v673
  %687 = vmatprep.subr.bf16.mxu0 0
  %688 = vmatpush1.bf16.msra.mxu0 0
  %689 = vmatprep.subr.bf16.mxu0 0
  %690 = vmatpush1.bf16.msra.mxu0 0
  %691 = vmatprep.subr.bf16.mxu0 0
  %692 = vmatpush1.bf16.msra.mxu0 0
  %693 = vmatprep.subr.bf16.mxu0 0
  %694 = vmatpush1.bf16.msra.mxu0 0
  %695 = vmatprep.subr.bf16.mxu0 0
  %696 = vmatpush1.bf16.msra.mxu0 0
  %697 = vmatprep.subr.bf16.mxu0 0
  %698 = vmatpush1.bf16.msra.mxu0 0
  %699 = vmatprep.subr.bf16.mxu0 0
  %700 = vmatpush1.bf16.msra.mxu0 0
  %701 = vmatprep.subr.bf16.mxu0 0
  %702 = vmatpush1.bf16.msra.mxu0 0
  %703 = vmatprep.subr.bf16.mxu0 0
  %704 = vmatpush1.bf16.msra.mxu0 0
  %705 = vmatprep.subr.bf16.mxu0 0
  %706 = vmatpush1.bf16.msra.mxu0 0
  %707 = vmatprep.subr.bf16.mxu0 0
  %708 = vmatpush1.bf16.msra.mxu0 0
  %709 = vmatprep.subr.bf16.mxu0 0
  %710 = vmatpush1.bf16.msra.mxu0 0
  %711 = vmatprep.subr.bf16.mxu0 0
  %712 = vmatpush1.bf16.msra.mxu0 0
  %713 = vmatprep.mubr.bf16.mxu0 0
  %714 = vmatmul.mubr.bf16.gmra.mrb[0].mxu0 %v181
  %v715 = vpop.f32.mrb[0].mxu0
  %v716 = vadd.f32 0.0, %v715
  %v717 = vpop.f32.mrb[0].mxu0
  %v718 = vadd.f32 0.0, %v717
  %v719 = vpop.f32.mrb[0].mxu0
  %v720 = vadd.f32 0.0, %v719
  %v721 = vpop.f32.mrb[0].mxu0
  %v722 = vadd.f32 0.0, %v721
  %723 = vmatprep.mubr.bf16.mxu0 0
  %724 = vmatmul.mubr.bf16.gmra.mrb[0].mxu0 %v184
  %v725 = vpop.f32.mrb[0].mxu0
  %v726 = vadd.f32 0.0, %v725
  %v727 = vpop.f32.mrb[0].mxu0
  %v728 = vadd.f32 0.0, %v727
  %v729 = vpop.f32.mrb[0].mxu0
  %v730 = vadd.f32 0.0, %v729
  %v731 = vpop.f32.mrb[0].mxu0
  %v732 = vadd.f32 0.0, %v731
  %733 = vmatprep.mubr.bf16.mxu0 0
  %734 = vmatmul.mubr.bf16.gmra.mrb[0].mxu0 %v187
  %v735 = vpop.f32.mrb[0].mxu0
  %v736 = vadd.f32 0.0, %v735
  %v737 = vpop.f32.mrb[0].mxu0
  %v738 = vadd.f32 0.0, %v737
  %v739 = vpop.f32.mrb[0].mxu0
  %v740 = vadd.f32 0.0, %v739
  %v741 = vpop.f32.mrb[0].mxu0
  %v742 = vadd.f32 0.0, %v741
  %743 = vmatprep.mubr.bf16.mxu0 0
  %744 = vmatmul.mubr.bf16.gmra.mrb[0].mxu0 %v190
  %v745 = vpop.f32.mrb[0].mxu0
  %v746 = vadd.f32 0.0, %v745
  %v747 = vpop.f32.mrb[0].mxu0
  %v748 = vadd.f32 0.0, %v747
  %v749 = vpop.f32.mrb[0].mxu0
  %v750 = vadd.f32 0.0, %v749
  %v751 = vpop.f32.mrb[0].mxu0
  %v752 = vadd.f32 0.0, %v751
  %753 = vmatprep.mubr.bf16.mxu0 0
  %754 = vmatmul.mubr.bf16.gmra.mrb[0].mxu0 %v193
  %v755 = vpop.f32.mrb[0].mxu0
  %v756 = vadd.f32 0.0, %v755
  %v757 = vpop.f32.mrb[0].mxu0
  %v758 = vadd.f32 0.0, %v757
  %v759 = vpop.f32.mrb[0].mxu0
  %v760 = vadd.f32 0.0, %v759
  %v761 = vpop.f32.mrb[0].mxu0
  %v762 = vadd.f32 0.0, %v761
  %763 = vmatprep.mubr.bf16.mxu0 0
  %764 = vmatmul.mubr.bf16.gmra.mrb[0].mxu0 %v196
  %v765 = vpop.f32.mrb[0].mxu0
  %v766 = vadd.f32 0.0, %v765
  %v767 = vpop.f32.mrb[0].mxu0
  %v768 = vadd.f32 0.0, %v767
  %v769 = vpop.f32.mrb[0].mxu0
  %v770 = vadd.f32 0.0, %v769
  %v771 = vpop.f32.mrb[0].mxu0
  %v772 = vadd.f32 0.0, %v771
  %773 = vmatprep.mubr.bf16.mxu0 0
  %774 = vmatmul.mubr.bf16.gmra.mrb[0].mxu0 %v199
  %v775 = vpop.f32.mrb[0].mxu0
  %v776 = vadd.f32 0.0, %v775
  %v777 = vpop.f32.mrb[0].mxu0
  %v778 = vadd.f32 0.0, %v777
  %v779 = vpop.f32.mrb[0].mxu0
  %v780 = vadd.f32 0.0, %v779
  %v781 = vpop.f32.mrb[0].mxu0
  %v782 = vadd.f32 0.0, %v781
  %783 = vmatprep.mubr.bf16.mxu0 0
  %784 = vmatmul.mubr.bf16.gmra.mrb[0].mxu0 %v202
  %v785 = vpop.f32.mrb[0].mxu0
  %v786 = vadd.f32 0.0, %v785
  %v787 = vpop.f32.mrb[0].mxu0
  %v788 = vadd.f32 0.0, %v787
  %v789 = vpop.f32.mrb[0].mxu0
  %v790 = vadd.f32 0.0, %v789
  %v791 = vpop.f32.mrb[0].mxu0
  %v792 = vadd.f32 0.0, %v791
  %793 = vmatprep.mubr.bf16.mxu0 0
  %794 = vmatmul.mubr.bf16.gmra.mrb[0].mxu0 %v205
  %v795 = vpop.f32.mrb[0].mxu0
  %v796 = vadd.f32 0.0, %v795
  %v797 = vpop.f32.mrb[0].mxu0
  %v798 = vadd.f32 0.0, %v797
  %v799 = vpop.f32.mrb[0].mxu0
  %v800 = vadd.f32 0.0, %v799
  %v801 = vpop.f32.mrb[0].mxu0
  %v802 = vadd.f32 0.0, %v801
  %803 = vmatprep.mubr.bf16.mxu0 0
  %804 = vmatmul.mubr.bf16.gmra.mrb[0].mxu0 %v208
  %v805 = vpop.f32.mrb[0].mxu0
  %v806 = vadd.f32 0.0, %v805
  %v807 = vpop.f32.mrb[0].mxu0
  %v808 = vadd.f32 0.0, %v807
  %v809 = vpop.f32.mrb[0].mxu0
  %v810 = vadd.f32 0.0, %v809
  %v811 = vpop.f32.mrb[0].mxu0
  %v812 = vadd.f32 0.0, %v811
  %813 = vmatprep.mubr.bf16.mxu0 0
  %814 = vmatmul.mubr.bf16.gmra.mrb[0].mxu0 %v211
  %v815 = vpop.f32.mrb[0].mxu0
  %v816 = vadd.f32 0.0, %v815
  %v817 = vpop.f32.mrb[0].mxu0
  %v818 = vadd.f32 0.0, %v817
  %v819 = vpop.f32.mrb[0].mxu0
  %v820 = vadd.f32 0.0, %v819
  %v821 = vpop.f32.mrb[0].mxu0
  %v822 = vadd.f32 0.0, %v821
  %823 = vmatprep.mubr.bf16.mxu0 0
  %824 = vmatmul.mubr.bf16.gmra.mrb[0].mxu0 %v214
  %v825 = vpop.f32.mrb[0].mxu0
  %v826 = vadd.f32 0.0, %v825
  %v827 = vpop.f32.mrb[0].mxu0
  %v828 = vadd.f32 0.0, %v827
  %v829 = vpop.f32.mrb[0].mxu0
  %v830 = vadd.f32 0.0, %v829
  %v831 = vpop.f32.mrb[0].mxu0
  %v832 = vadd.f32 0.0, %v831
  %833 = vmatprep.mubr.bf16.mxu0 0
  %834 = vmatmul.mubr.bf16.gmra.mrb[0].mxu0 %v217
  %v835 = vpop.f32.mrb[0].mxu0
  %v836 = vadd.f32 0.0, %v835
  %v837 = vpop.f32.mrb[0].mxu0
  %v838 = vadd.f32 0.0, %v837
  %v839 = vpop.f32.mrb[0].mxu0
  %v840 = vadd.f32 0.0, %v839
  %v841 = vpop.f32.mrb[0].mxu0
  %v842 = vadd.f32 0.0, %v841
  %843 = vmatprep.mubr.bf16.mxu0 0
  %844 = vmatmul.mubr.bf16.gmra.mrb[0].mxu0 %v220
  %v845 = vpop.f32.mrb[0].mxu0
  %v846 = vadd.f32 0.0, %v845
  %v847 = vpop.f32.mrb[0].mxu0
  %v848 = vadd.f32 0.0, %v847
  %v849 = vpop.f32.mrb[0].mxu0
  %v850 = vadd.f32 0.0, %v849
  %v851 = vpop.f32.mrb[0].mxu0
  %v852 = vadd.f32 0.0, %v851
  %853 = vmatprep.mubr.bf16.mxu0 0
  %854 = vmatmul.mubr.bf16.gmra.mrb[0].mxu0 %v223
  %v855 = vpop.f32.mrb[0].mxu0
  %v856 = vadd.f32 0.0, %v855
  %v857 = vpop.f32.mrb[0].mxu0
  %v858 = vadd.f32 0.0, %v857
  %v859 = vpop.f32.mrb[0].mxu0
  %v860 = vadd.f32 0.0, %v859
  %v861 = vpop.f32.mrb[0].mxu0
  %v862 = vadd.f32 0.0, %v861
  %863 = vmatprep.mubr.bf16.mxu0 0
  %864 = vmatmul.mubr.bf16.gmra.mrb[0].mxu0 %v449
  %v865 = vpop.f32.mrb[0].mxu0
  %v866 = vadd.f32 0.0, %v865
  %v867 = vpop.f32.mrb[0].mxu0
  %v868 = vadd.f32 0.0, %v867
  %v869 = vpop.f32.mrb[0].mxu0
  %v870 = vadd.f32 0.0, %v869
  %v871 = vpop.f32.mrb[0].mxu0
  %v872 = vadd.f32 0.0, %v871
  %873 = vdwg.mxu0
  %v874 = vadd.f32 %v486, %v716
  %v875 = vadd.f32 %v488, %v718
  %v876 = vadd.f32 %v490, %v720
  %v877 = vadd.f32 %v492, %v722
  %v878 = vadd.f32 %v496, %v726
  %v879 = vadd.f32 %v498, %v728
  %v880 = vadd.f32 %v500, %v730
  %v881 = vadd.f32 %v502, %v732
  %v882 = vadd.f32 %v506, %v736
  %v883 = vadd.f32 %v508, %v738
  %v884 = vadd.f32 %v510, %v740
  %v885 = vadd.f32 %v512, %v742
  %v886 = vadd.f32 %v516, %v746
  %v887 = vadd.f32 %v518, %v748
  %v888 = vadd.f32 %v520, %v750
  %v889 = vadd.f32 %v522, %v752
  %v890 = vadd.f32 %v526, %v756
  %v891 = vadd.f32 %v528, %v758
  %v892 = vadd.f32 %v530, %v760
  %v893 = vadd.f32 %v532, %v762
  %v894 = vadd.f32 %v536, %v766
  %v895 = vadd.f32 %v538, %v768
  %v896 = vadd.f32 %v540, %v770
  %v897 = vadd.f32 %v542, %v772
  %v898 = vadd.f32 %v546, %v776
  %v899 = vadd.f32 %v548, %v778
  %v900 = vadd.f32 %v550, %v780
  %v901 = vadd.f32 %v552, %v782
  %v902 = vadd.f32 %v556, %v786
  %v903 = vadd.f32 %v558, %v788
  %v904 = vadd.f32 %v560, %v790
  %v905 = vadd.f32 %v562, %v792
  %v906 = vadd.f32 %v566, %v796
  %v907 = vadd.f32 %v568, %v798
  %v908 = vadd.f32 %v570, %v800
  %v909 = vadd.f32 %v572, %v802
  %v910 = vadd.f32 %v576, %v806
  %v911 = vadd.f32 %v578, %v808
  %v912 = vadd.f32 %v580, %v810
  %v913 = vadd.f32 %v582, %v812
  %v914 = vadd.f32 %v586, %v816
  %v915 = vadd.f32 %v588, %v818
  %v916 = vadd.f32 %v590, %v820
  %v917 = vadd.f32 %v592, %v822
  %v918 = vadd.f32 %v596, %v826
  %v919 = vadd.f32 %v598, %v828
  %v920 = vadd.f32 %v600, %v830
  %v921 = vadd.f32 %v602, %v832
  %v922 = vadd.f32 %v606, %v836
  %v923 = vadd.f32 %v608, %v838
  %v924 = vadd.f32 %v610, %v840
  %v925 = vadd.f32 %v612, %v842
  %v926 = vadd.f32 %v616, %v846
  %v927 = vadd.f32 %v618, %v848
  %v928 = vadd.f32 %v620, %v850
  %v929 = vadd.f32 %v622, %v852
  %v930 = vadd.f32 %v626, %v856
  %v931 = vadd.f32 %v628, %v858
  %v932 = vadd.f32 %v630, %v860
  %v933 = vadd.f32 %v632, %v862
  %v934 = vadd.f32 %v636, %v866
  %v935 = vadd.f32 %v638, %v868
  %v936 = vadd.f32 %v640, %v870
  %v937 = vadd.f32 %v642, %v872
  %v938 = vmax.f32 %v874, %v875
  %v939 = vmax.f32 %v876, %v877
  %v940 = vmax.f32 %v878, %v879
  %v941 = vmax.f32 %v880, %v881
  %v942 = vmax.f32 %v882, %v883
  %v943 = vmax.f32 %v884, %v885
  %v944 = vmax.f32 %v886, %v887
  %v945 = vmax.f32 %v888, %v889
  %v946 = vmax.f32 %v890, %v891
  %v947 = vmax.f32 %v892, %v893
  %v948 = vmax.f32 %v894, %v895
  %v949 = vmax.f32 %v896, %v897
  %v950 = vmax.f32 %v898, %v899
  %v951 = vmax.f32 %v900, %v901
  %v952 = vmax.f32 %v902, %v903
  %v953 = vmax.f32 %v904, %v905
  %v954 = vmax.f32 %v906, %v907
  %v955 = vmax.f32 %v908, %v909
  %v956 = vmax.f32 %v910, %v911
  %v957 = vmax.f32 %v912, %v913
  %v958 = vmax.f32 %v914, %v915
  %v959 = vmax.f32 %v916, %v917
  %v960 = vmax.f32 %v918, %v919
  %v961 = vmax.f32 %v920, %v921
  %v962 = vmax.f32 %v922, %v923
  %v963 = vmax.f32 %v924, %v925
  %v964 = vmax.f32 %v926, %v927
  %v965 = vmax.f32 %v928, %v929
  %v966 = vmax.f32 %v930, %v931
  %v967 = vmax.f32 %v932, %v933
  %v968 = vmax.f32 %v934, %v935
  %v969 = vmax.f32 %v936, %v937
  %v970 = vld [vmem:[%s2] sm:$0x1]
  %v972 = vlaneseq
  %v973 = vshrl.u32 %v972, 7
  %v974 = vsub.s32 0, %v973
  %v975 = vrot.slane %v970, %v974
  %v977 = vadd.f32 %v938, %v975
  %v978 = vadd.f32 %v939, %v975
  %v979 = vadd.f32 %v940, %v975
  %v980 = vadd.f32 %v941, %v975
  %v981 = vadd.f32 %v942, %v975
  %v982 = vadd.f32 %v943, %v975
  %v983 = vadd.f32 %v944, %v975
  %v984 = vadd.f32 %v945, %v975
  %v985 = vadd.f32 %v946, %v975
  %v986 = vadd.f32 %v947, %v975
  %v987 = vadd.f32 %v948, %v975
  %v988 = vadd.f32 %v949, %v975
  %v989 = vadd.f32 %v950, %v975
  %v990 = vadd.f32 %v951, %v975
  %v991 = vadd.f32 %v952, %v975
  %v992 = vadd.f32 %v953, %v975
  %v993 = vadd.f32 %v954, %v975
  %v994 = vadd.f32 %v955, %v975
  %v995 = vadd.f32 %v956, %v975
  %v996 = vadd.f32 %v957, %v975
  %v997 = vadd.f32 %v958, %v975
  %v998 = vadd.f32 %v959, %v975
  %v999 = vadd.f32 %v960, %v975
  %v1000 = vadd.f32 %v961, %v975
  %v1001 = vadd.f32 %v962, %v975
  %v1002 = vadd.f32 %v963, %v975
  %v1003 = vadd.f32 %v964, %v975
  %v1004 = vadd.f32 %v965, %v975
  %v1005 = vadd.f32 %v966, %v975
  %v1006 = vadd.f32 %v967, %v975
  %v1007 = vadd.f32 %v968, %v975
  %v1008 = vadd.f32 %v969, %v975
  %v1009 = vmax.f32 %v977, 0.0
  %v1010 = vmax.f32 %v978, 0.0
  %v1011 = vmax.f32 %v979, 0.0
  %v1012 = vmax.f32 %v980, 0.0
  %v1013 = vmax.f32 %v981, 0.0
  %v1014 = vmax.f32 %v982, 0.0
  %v1015 = vmax.f32 %v983, 0.0
  %v1016 = vmax.f32 %v984, 0.0
  %v1017 = vmax.f32 %v985, 0.0
  %v1018 = vmax.f32 %v986, 0.0
  %v1019 = vmax.f32 %v987, 0.0
  %v1020 = vmax.f32 %v988, 0.0
  %v1021 = vmax.f32 %v989, 0.0
  %v1022 = vmax.f32 %v990, 0.0
  %v1023 = vmax.f32 %v991, 0.0
  %v1024 = vmax.f32 %v992, 0.0
  %v1025 = vmax.f32 %v993, 0.0
  %v1026 = vmax.f32 %v994, 0.0
  %v1027 = vmax.f32 %v995, 0.0
  %v1028 = vmax.f32 %v996, 0.0
  %v1029 = vmax.f32 %v997, 0.0
  %v1030 = vmax.f32 %v998, 0.0
  %v1031 = vmax.f32 %v999, 0.0
  %v1032 = vmax.f32 %v1000, 0.0
  %v1033 = vmax.f32 %v1001, 0.0
  %v1034 = vmax.f32 %v1002, 0.0
  %v1035 = vmax.f32 %v1003, 0.0
  %v1036 = vmax.f32 %v1004, 0.0
  %v1037 = vmax.f32 %v1005, 0.0
  %v1038 = vmax.f32 %v1006, 0.0
  %v1039 = vmax.f32 %v1007, 0.0
  %v1040 = vmax.f32 %v1008, 0.0
  %v1041 = vmax.f32 %v1009, %v1011
  %v1042 = vmax.f32 %v1010, %v1012
  %v1043 = vmax.f32 %v1013, %v1015
  %v1044 = vmax.f32 %v1014, %v1016
  %v1045 = vmax.f32 %v1017, %v1019
  %v1046 = vmax.f32 %v1018, %v1020
  %v1047 = vmax.f32 %v1021, %v1023
  %v1048 = vmax.f32 %v1022, %v1024
  %v1049 = vmax.f32 %v1025, %v1027
  %v1050 = vmax.f32 %v1026, %v1028
  %v1051 = vmax.f32 %v1029, %v1031
  %v1052 = vmax.f32 %v1030, %v1032
  %v1053 = vmax.f32 %v1033, %v1035
  %v1054 = vmax.f32 %v1034, %v1036
  %v1055 = vmax.f32 %v1037, %v1039
  %v1056 = vmax.f32 %v1038, %v1040
  %v1057 = vpack.c.bf16 %v1042, %v1041
  %v1058 = vpack.c.bf16 %v1044, %v1043
  %v1059 = vpack.c.bf16 %v1046, %v1045
  %v1060 = vpack.c.bf16 %v1048, %v1047
  %v1061 = vpack.c.bf16 %v1050, %v1049
  %v1062 = vpack.c.bf16 %v1052, %v1051
  %v1063 = vpack.c.bf16 %v1054, %v1053
  %v1064 = vpack.c.bf16 %v1056, %v1055
  %v1065 = vld [vmem:[%s3] sm:$0xf]
  %v1066 = vld [vmem:[%s3 + $0x4] sm:$0xf]
  %v1067 = vld [vmem:[%s3 + $0x8] sm:$0xf]
  %v1068 = vld [vmem:[%s3 + $0xc] sm:$0xf]
  %v1069 = vld [vmem:[%s3 + $0x10] sm:$0xf]
  %v1070 = vld [vmem:[%s3 + $0x14] sm:$0xf]
  %v1071 = vld [vmem:[%s3 + $0x18] sm:$0xf]
  %v1072 = vld [vmem:[%s3 + $0x1c] sm:$0xf]
  %v1073 = vld [vmem:[%s3 + $0x20] sm:$0xf]
  %v1074 = vld [vmem:[%s3 + $0x24] sm:$0xf]
  %v1075 = vld [vmem:[%s3 + $0x28] sm:$0xf]
  %v1076 = vld [vmem:[%s3 + $0x2c] sm:$0xf]
  %v1077 = vld [vmem:[%s3 + $0x30] sm:$0xf]
  %v1078 = vld [vmem:[%s3 + $0x34] sm:$0xf]
  %v1079 = vld [vmem:[%s3 + $0x38] sm:$0xf]
  %v1080 = vld [vmem:[%s3 + $0x3c] sm:$0xf]
  %s1081 = scalar_lea.vmem %s3, 64
  %v1082 = vld [vmem:[%s1081] sm:$0xf]
  %v1083 = vld [vmem:[%s1081 + $0x4] sm:$0xf]
  %v1084 = vld [vmem:[%s1081 + $0x8] sm:$0xf]
  %v1085 = vld [vmem:[%s1081 + $0xc] sm:$0xf]
  %v1086 = vld [vmem:[%s1081 + $0x10] sm:$0xf]
  %v1087 = vld [vmem:[%s1081 + $0x14] sm:$0xf]
  %v1088 = vld [vmem:[%s1081 + $0x18] sm:$0xf]
  %v1089 = vld [vmem:[%s1081 + $0x1c] sm:$0xf]
  %v1090 = vld [vmem:[%s1081 + $0x20] sm:$0xf]
  %v1091 = vld [vmem:[%s1081 + $0x24] sm:$0xf]
  %v1092 = vld [vmem:[%s1081 + $0x28] sm:$0xf]
  %v1093 = vld [vmem:[%s1081 + $0x2c] sm:$0xf]
  %v1094 = vld [vmem:[%s1081 + $0x30] sm:$0xf]
  %v1095 = vld [vmem:[%s1081 + $0x34] sm:$0xf]
  %v1096 = vld [vmem:[%s1081 + $0x38] sm:$0xf]
  %v1097 = vld [vmem:[%s1081 + $0x3c] sm:$0xf]
  %v1114 = vunpack.c.l.b16 %v1082
  %v1115 = vunpack.c.l.b16 %v1083
  %v1116 = vunpack.c.l.b16 %v1084
  %v1117 = vunpack.c.l.b16 %v1085
  %v1118 = vunpack.c.l.b16 %v1086
  %v1119 = vunpack.c.l.b16 %v1087
  %v1120 = vunpack.c.l.b16 %v1088
  %v1121 = vunpack.c.l.b16 %v1089
  %v1122 = vunpack.c.l.b16 %v1090
  %v1123 = vunpack.c.l.b16 %v1091
  %v1124 = vunpack.c.l.b16 %v1092
  %v1125 = vunpack.c.l.b16 %v1093
  %v1126 = vunpack.c.l.b16 %v1094
  %v1127 = vunpack.c.l.b16 %v1095
  %v1128 = vunpack.c.l.b16 %v1096
  %v1129 = vunpack.c.l.b16 %v1097
  %v1130 = vpack.c.b16 %v1115, %v1114
  %v1131 = vpack.c.b16 %v1117, %v1116
  %v1132 = vpack.c.b16 %v1119, %v1118
  %v1133 = vpack.c.b16 %v1121, %v1120
  %v1134 = vpack.c.b16 %v1123, %v1122
  %v1135 = vpack.c.b16 %v1125, %v1124
  %v1136 = vpack.c.b16 %v1127, %v1126
  %v1137 = vpack.c.b16 %v1129, %v1128
  %1146 = vmatprep.subr.bf16.mxu0 0
  %1147 = vmatpush1.bf16.msra.mxu0 %v1130
  %1148 = vmatprep.subr.bf16.mxu0 0
  %1149 = vmatpush1.bf16.msra.mxu0 %v1131
  %1150 = vmatprep.subr.bf16.mxu0 0
  %1151 = vmatpush1.bf16.msra.mxu0 %v1132
  %1152 = vmatprep.subr.bf16.mxu0 0
  %1153 = vmatpush1.bf16.msra.mxu0 %v1133
  %1154 = vmatprep.subr.bf16.mxu0 0
  %1155 = vmatpush1.bf16.msra.mxu0 %v1134
  %1156 = vmatprep.subr.bf16.mxu0 0
  %1157 = vmatpush1.bf16.msra.mxu0 %v1135
  %1158 = vmatprep.subr.bf16.mxu0 0
  %1159 = vmatpush1.bf16.msra.mxu0 %v1136
  %1160 = vmatprep.subr.bf16.mxu0 0
  %1161 = vmatpush1.bf16.msra.mxu0 %v1137
  %1162 = vmatprep.subr.bf16.mxu0 0
  %1163 = vmatpush1.bf16.msra.mxu0 0
  %1164 = vmatprep.subr.bf16.mxu0 0
  %1165 = vmatpush1.bf16.msra.mxu0 0
  %1166 = vmatprep.subr.bf16.mxu0 0
  %1167 = vmatpush1.bf16.msra.mxu0 0
  %1168 = vmatprep.subr.bf16.mxu0 0
  %1169 = vmatpush1.bf16.msra.mxu0 0
  %1170 = vmatprep.subr.bf16.mxu0 0
  %1171 = vmatpush1.bf16.msra.mxu0 0
  %1172 = vmatprep.subr.bf16.mxu0 0
  %1173 = vmatpush1.bf16.msra.mxu0 0
  %1174 = vmatprep.subr.bf16.mxu0 0
  %1175 = vmatpush1.bf16.msra.mxu0 0
  %1176 = vmatprep.subr.bf16.mxu0 0
  %1177 = vmatpush1.bf16.msra.mxu0 0
  %1178 = vmatprep.mubr.bf16.mxu0 0
  %1179 = vmatmul.mubr.bf16.gmra.mrb[0].mxu0 %v1057
  %v1180 = vpop.f32.mrb[0].mxu0
  %v1181 = vadd.f32 0.0, %v1180
  %v1182 = vpop.f32.mrb[0].mxu0
  %v1183 = vpop.f32.mrb[0].mxu0
  %v1184 = vadd.f32 0.0, %v1183
  %v1185 = vpop.f32.mrb[0].mxu0
  %1186 = vmatprep.mubr.bf16.mxu0 0
  %1187 = vmatmul.mubr.bf16.gmra.mrb[0].mxu0 %v1058
  %v1188 = vpop.f32.mrb[0].mxu0
  %v1189 = vadd.f32 0.0, %v1188
  %v1190 = vpop.f32.mrb[0].mxu0
  %v1191 = vpop.f32.mrb[0].mxu0
  %v1192 = vadd.f32 0.0, %v1191
  %v1193 = vpop.f32.mrb[0].mxu0
  %1194 = vmatprep.mubr.bf16.mxu0 0
  %1195 = vmatmul.mubr.bf16.gmra.mrb[0].mxu0 %v1059
  %v1196 = vpop.f32.mrb[0].mxu0
  %v1197 = vadd.f32 0.0, %v1196
  %v1198 = vpop.f32.mrb[0].mxu0
  %v1199 = vpop.f32.mrb[0].mxu0
  %v1200 = vadd.f32 0.0, %v1199
  %v1201 = vpop.f32.mrb[0].mxu0
  %1202 = vmatprep.mubr.bf16.mxu0 0
  %1203 = vmatmul.mubr.bf16.gmra.mrb[0].mxu0 %v1060
  %v1204 = vpop.f32.mrb[0].mxu0
  %v1205 = vadd.f32 0.0, %v1204
  %v1206 = vpop.f32.mrb[0].mxu0
  %v1207 = vpop.f32.mrb[0].mxu0
  %v1208 = vadd.f32 0.0, %v1207
  %v1209 = vpop.f32.mrb[0].mxu0
  %1210 = vmatprep.mubr.bf16.mxu0 0
  %1211 = vmatmul.mubr.bf16.gmra.mrb[0].mxu0 %v1061
  %v1212 = vpop.f32.mrb[0].mxu0
  %v1213 = vadd.f32 0.0, %v1212
  %v1214 = vpop.f32.mrb[0].mxu0
  %v1215 = vpop.f32.mrb[0].mxu0
  %v1216 = vadd.f32 0.0, %v1215
  %v1217 = vpop.f32.mrb[0].mxu0
  %1218 = vmatprep.mubr.bf16.mxu0 0
  %1219 = vmatmul.mubr.bf16.gmra.mrb[0].mxu0 %v1062
  %v1220 = vpop.f32.mrb[0].mxu0
  %v1221 = vadd.f32 0.0, %v1220
  %v1222 = vpop.f32.mrb[0].mxu0
  %v1223 = vpop.f32.mrb[0].mxu0
  %v1224 = vadd.f32 0.0, %v1223
  %v1225 = vpop.f32.mrb[0].mxu0
  %1226 = vmatprep.mubr.bf16.mxu0 0
  %1227 = vmatmul.mubr.bf16.gmra.mrb[0].mxu0 %v1063
  %v1228 = vpop.f32.mrb[0].mxu0
  %v1229 = vadd.f32 0.0, %v1228
  %v1230 = vpop.f32.mrb[0].mxu0
  %v1231 = vpop.f32.mrb[0].mxu0
  %v1232 = vadd.f32 0.0, %v1231
  %v1233 = vpop.f32.mrb[0].mxu0
  %1234 = vmatprep.mubr.bf16.mxu0 0
  %1235 = vmatmul.mubr.bf16.gmra.mrb[0].mxu0 %v1064
  %v1236 = vpop.f32.mrb[0].mxu0
  %v1237 = vadd.f32 0.0, %v1236
  %v1238 = vpop.f32.mrb[0].mxu0
  %v1239 = vpop.f32.mrb[0].mxu0
  %v1240 = vadd.f32 0.0, %v1239
  %v1241 = vpop.f32.mrb[0].mxu0
  %1242 = vdwg.mxu0
  %v1259 = vunpack.c.l.b16 %v1065
  %v1260 = vunpack.c.l.b16 %v1066
  %v1261 = vunpack.c.l.b16 %v1067
  %v1262 = vunpack.c.l.b16 %v1068
  %v1263 = vunpack.c.l.b16 %v1069
  %v1264 = vunpack.c.l.b16 %v1070
  %v1265 = vunpack.c.l.b16 %v1071
  %v1266 = vunpack.c.l.b16 %v1072
  %v1267 = vunpack.c.l.b16 %v1073
  %v1268 = vunpack.c.l.b16 %v1074
  %v1269 = vunpack.c.l.b16 %v1075
  %v1270 = vunpack.c.l.b16 %v1076
  %v1271 = vunpack.c.l.b16 %v1077
  %v1272 = vunpack.c.l.b16 %v1078
  %v1273 = vunpack.c.l.b16 %v1079
  %v1274 = vunpack.c.l.b16 %v1080
  %v1275 = vpack.c.b16 %v1260, %v1259
  %v1276 = vpack.c.b16 %v1262, %v1261
  %v1277 = vpack.c.b16 %v1264, %v1263
  %v1278 = vpack.c.b16 %v1266, %v1265
  %v1279 = vpack.c.b16 %v1268, %v1267
  %v1280 = vpack.c.b16 %v1270, %v1269
  %v1281 = vpack.c.b16 %v1272, %v1271
  %v1282 = vpack.c.b16 %v1274, %v1273
  %1291 = vmatprep.subr.bf16.mxu0 0
  %1292 = vmatpush1.bf16.msra.mxu0 %v1275
  %1293 = vmatprep.subr.bf16.mxu0 0
  %1294 = vmatpush1.bf16.msra.mxu0 %v1276
  %1295 = vmatprep.subr.bf16.mxu0 0
  %1296 = vmatpush1.bf16.msra.mxu0 %v1277
  %1297 = vmatprep.subr.bf16.mxu0 0
  %1298 = vmatpush1.bf16.msra.mxu0 %v1278
  %1299 = vmatprep.subr.bf16.mxu0 0
  %1300 = vmatpush1.bf16.msra.mxu0 %v1279
  %1301 = vmatprep.subr.bf16.mxu0 0
  %1302 = vmatpush1.bf16.msra.mxu0 %v1280
  %1303 = vmatprep.subr.bf16.mxu0 0
  %1304 = vmatpush1.bf16.msra.mxu0 %v1281
  %1305 = vmatprep.subr.bf16.mxu0 0
  %1306 = vmatpush1.bf16.msra.mxu0 %v1282
  %1307 = vmatprep.subr.bf16.mxu0 0
  %1308 = vmatpush1.bf16.msra.mxu0 0
  %1309 = vmatprep.subr.bf16.mxu0 0
  %1310 = vmatpush1.bf16.msra.mxu0 0
  %1311 = vmatprep.subr.bf16.mxu0 0
  %1312 = vmatpush1.bf16.msra.mxu0 0
  %1313 = vmatprep.subr.bf16.mxu0 0
  %1314 = vmatpush1.bf16.msra.mxu0 0
  %1315 = vmatprep.subr.bf16.mxu0 0
  %1316 = vmatpush1.bf16.msra.mxu0 0
  %1317 = vmatprep.subr.bf16.mxu0 0
  %1318 = vmatpush1.bf16.msra.mxu0 0
  %1319 = vmatprep.subr.bf16.mxu0 0
  %1320 = vmatpush1.bf16.msra.mxu0 0
  %1321 = vmatprep.subr.bf16.mxu0 0
  %1322 = vmatpush1.bf16.msra.mxu0 0
  %1323 = vmatprep.mubr.bf16.mxu0 0
  %1324 = vmatmul.mubr.bf16.gmra.mrb[0].mxu0 0
  %v1325 = vpop.f32.mrb[0].mxu0
  %v1326 = vadd.f32 %v1181, %v1325
  %v1327 = vpop.f32.mrb[0].mxu0
  %v1328 = vpop.f32.mrb[0].mxu0
  %v1329 = vadd.f32 %v1184, %v1328
  %v1330 = vpop.f32.mrb[0].mxu0
  %1331 = vmatprep.mubr.bf16.mxu0 0
  %1332 = vmatmul.mubr.bf16.gmra.mrb[0].mxu0 %v1057
  %v1333 = vpop.f32.mrb[0].mxu0
  %v1334 = vadd.f32 %v1189, %v1333
  %v1335 = vpop.f32.mrb[0].mxu0
  %v1336 = vpop.f32.mrb[0].mxu0
  %v1337 = vadd.f32 %v1192, %v1336
  %v1338 = vpop.f32.mrb[0].mxu0
  %1339 = vmatprep.mubr.bf16.mxu0 0
  %1340 = vmatmul.mubr.bf16.gmra.mrb[0].mxu0 %v1058
  %v1341 = vpop.f32.mrb[0].mxu0
  %v1342 = vadd.f32 %v1197, %v1341
  %v1343 = vpop.f32.mrb[0].mxu0
  %v1344 = vpop.f32.mrb[0].mxu0
  %v1345 = vadd.f32 %v1200, %v1344
  %v1346 = vpop.f32.mrb[0].mxu0
  %1347 = vmatprep.mubr.bf16.mxu0 0
  %1348 = vmatmul.mubr.bf16.gmra.mrb[0].mxu0 %v1059
  %v1349 = vpop.f32.mrb[0].mxu0
  %v1350 = vadd.f32 %v1205, %v1349
  %v1351 = vpop.f32.mrb[0].mxu0
  %v1352 = vpop.f32.mrb[0].mxu0
  %v1353 = vadd.f32 %v1208, %v1352
  %v1354 = vpop.f32.mrb[0].mxu0
  %1355 = vmatprep.mubr.bf16.mxu0 0
  %1356 = vmatmul.mubr.bf16.gmra.mrb[0].mxu0 %v1060
  %v1357 = vpop.f32.mrb[0].mxu0
  %v1358 = vadd.f32 %v1213, %v1357
  %v1359 = vpop.f32.mrb[0].mxu0
  %v1360 = vpop.f32.mrb[0].mxu0
  %v1361 = vadd.f32 %v1216, %v1360
  %v1362 = vpop.f32.mrb[0].mxu0
  %1363 = vmatprep.mubr.bf16.mxu0 0
  %1364 = vmatmul.mubr.bf16.gmra.mrb[0].mxu0 %v1061
  %v1365 = vpop.f32.mrb[0].mxu0
  %v1366 = vadd.f32 %v1221, %v1365
  %v1367 = vpop.f32.mrb[0].mxu0
  %v1368 = vpop.f32.mrb[0].mxu0
  %v1369 = vadd.f32 %v1224, %v1368
  %v1370 = vpop.f32.mrb[0].mxu0
  %1371 = vmatprep.mubr.bf16.mxu0 0
  %1372 = vmatmul.mubr.bf16.gmra.mrb[0].mxu0 %v1062
  %v1373 = vpop.f32.mrb[0].mxu0
  %v1374 = vadd.f32 %v1229, %v1373
  %v1375 = vpop.f32.mrb[0].mxu0
  %v1376 = vpop.f32.mrb[0].mxu0
  %v1377 = vadd.f32 %v1232, %v1376
  %v1378 = vpop.f32.mrb[0].mxu0
  %1379 = vmatprep.mubr.bf16.mxu0 0
  %1380 = vmatmul.mubr.bf16.gmra.mrb[0].mxu0 %v1063
  %v1381 = vpop.f32.mrb[0].mxu0
  %v1382 = vadd.f32 %v1237, %v1381
  %v1383 = vpop.f32.mrb[0].mxu0
  %v1384 = vpop.f32.mrb[0].mxu0
  %v1385 = vadd.f32 %v1240, %v1384
  %v1386 = vpop.f32.mrb[0].mxu0
  %1387 = vdwg.mxu0
  %s1388 = scalar_lea.vmem %s3, 128
  %v1389 = vld [vmem:[%s1388] sm:$0xf]
  %v1390 = vld [vmem:[%s1388 + $0x4] sm:$0xf]
  %v1391 = vld [vmem:[%s1388 + $0x8] sm:$0xf]
  %v1392 = vld [vmem:[%s1388 + $0xc] sm:$0xf]
  %v1393 = vld [vmem:[%s1388 + $0x10] sm:$0xf]
  %v1394 = vld [vmem:[%s1388 + $0x14] sm:$0xf]
  %v1395 = vld [vmem:[%s1388 + $0x18] sm:$0xf]
  %v1396 = vld [vmem:[%s1388 + $0x1c] sm:$0xf]
  %v1397 = vld [vmem:[%s1388 + $0x20] sm:$0xf]
  %v1398 = vld [vmem:[%s1388 + $0x24] sm:$0xf]
  %v1399 = vld [vmem:[%s1388 + $0x28] sm:$0xf]
  %v1400 = vld [vmem:[%s1388 + $0x2c] sm:$0xf]
  %v1401 = vld [vmem:[%s1388 + $0x30] sm:$0xf]
  %v1402 = vld [vmem:[%s1388 + $0x34] sm:$0xf]
  %v1403 = vld [vmem:[%s1388 + $0x38] sm:$0xf]
  %v1404 = vld [vmem:[%s1388 + $0x3c] sm:$0xf]
  %v1421 = vunpack.c.l.b16 %v1389
  %v1422 = vunpack.c.l.b16 %v1390
  %v1423 = vunpack.c.l.b16 %v1391
  %v1424 = vunpack.c.l.b16 %v1392
  %v1425 = vunpack.c.l.b16 %v1393
  %v1426 = vunpack.c.l.b16 %v1394
  %v1427 = vunpack.c.l.b16 %v1395
  %v1428 = vunpack.c.l.b16 %v1396
  %v1429 = vunpack.c.l.b16 %v1397
  %v1430 = vunpack.c.l.b16 %v1398
  %v1431 = vunpack.c.l.b16 %v1399
  %v1432 = vunpack.c.l.b16 %v1400
  %v1433 = vunpack.c.l.b16 %v1401
  %v1434 = vunpack.c.l.b16 %v1402
  %v1435 = vunpack.c.l.b16 %v1403
  %v1436 = vunpack.c.l.b16 %v1404
  %v1437 = vpack.c.b16 %v1422, %v1421
  %v1438 = vpack.c.b16 %v1424, %v1423
  %v1439 = vpack.c.b16 %v1426, %v1425
  %v1440 = vpack.c.b16 %v1428, %v1427
  %v1441 = vpack.c.b16 %v1430, %v1429
  %v1442 = vpack.c.b16 %v1432, %v1431
  %v1443 = vpack.c.b16 %v1434, %v1433
  %v1444 = vpack.c.b16 %v1436, %v1435
  %1453 = vmatprep.subr.bf16.mxu0 0
  %1454 = vmatpush1.bf16.msra.mxu0 %v1437
  %1455 = vmatprep.subr.bf16.mxu0 0
  %1456 = vmatpush1.bf16.msra.mxu0 %v1438
  %1457 = vmatprep.subr.bf16.mxu0 0
  %1458 = vmatpush1.bf16.msra.mxu0 %v1439
  %1459 = vmatprep.subr.bf16.mxu0 0
  %1460 = vmatpush1.bf16.msra.mxu0 %v1440
  %1461 = vmatprep.subr.bf16.mxu0 0
  %1462 = vmatpush1.bf16.msra.mxu0 %v1441
  %1463 = vmatprep.subr.bf16.mxu0 0
  %1464 = vmatpush1.bf16.msra.mxu0 %v1442
  %1465 = vmatprep.subr.bf16.mxu0 0
  %1466 = vmatpush1.bf16.msra.mxu0 %v1443
  %1467 = vmatprep.subr.bf16.mxu0 0
  %1468 = vmatpush1.bf16.msra.mxu0 %v1444
  %1469 = vmatprep.subr.bf16.mxu0 0
  %1470 = vmatpush1.bf16.msra.mxu0 0
  %1471 = vmatprep.subr.bf16.mxu0 0
  %1472 = vmatpush1.bf16.msra.mxu0 0
  %1473 = vmatprep.subr.bf16.mxu0 0
  %1474 = vmatpush1.bf16.msra.mxu0 0
  %1475 = vmatprep.subr.bf16.mxu0 0
  %1476 = vmatpush1.bf16.msra.mxu0 0
  %1477 = vmatprep.subr.bf16.mxu0 0
  %1478 = vmatpush1.bf16.msra.mxu0 0
  %1479 = vmatprep.subr.bf16.mxu0 0
  %1480 = vmatpush1.bf16.msra.mxu0 0
  %1481 = vmatprep.subr.bf16.mxu0 0
  %1482 = vmatpush1.bf16.msra.mxu0 0
  %1483 = vmatprep.subr.bf16.mxu0 0
  %1484 = vmatpush1.bf16.msra.mxu0 0
  %1485 = vmatprep.mubr.bf16.mxu0 0
  %1486 = vmatmul.mubr.bf16.gmra.mrb[0].mxu0 %v1058
  %v1487 = vpop.f32.mrb[0].mxu0
  %v1488 = vadd.f32 0.0, %v1487
  %v1489 = vpop.f32.mrb[0].mxu0
  %v1490 = vpop.f32.mrb[0].mxu0
  %v1491 = vadd.f32 0.0, %v1490
  %v1492 = vpop.f32.mrb[0].mxu0
  %1493 = vmatprep.mubr.bf16.mxu0 0
  %1494 = vmatmul.mubr.bf16.gmra.mrb[0].mxu0 %v1059
  %v1495 = vpop.f32.mrb[0].mxu0
  %v1496 = vadd.f32 0.0, %v1495
  %v1497 = vpop.f32.mrb[0].mxu0
  %v1498 = vpop.f32.mrb[0].mxu0
  %v1499 = vadd.f32 0.0, %v1498
  %v1500 = vpop.f32.mrb[0].mxu0
  %1501 = vmatprep.mubr.bf16.mxu0 0
  %1502 = vmatmul.mubr.bf16.gmra.mrb[0].mxu0 %v1060
  %v1503 = vpop.f32.mrb[0].mxu0
  %v1504 = vadd.f32 0.0, %v1503
  %v1505 = vpop.f32.mrb[0].mxu0
  %v1506 = vpop.f32.mrb[0].mxu0
  %v1507 = vadd.f32 0.0, %v1506
  %v1508 = vpop.f32.mrb[0].mxu0
  %1509 = vmatprep.mubr.bf16.mxu0 0
  %1510 = vmatmul.mubr.bf16.gmra.mrb[0].mxu0 %v1061
  %v1511 = vpop.f32.mrb[0].mxu0
  %v1512 = vadd.f32 0.0, %v1511
  %v1513 = vpop.f32.mrb[0].mxu0
  %v1514 = vpop.f32.mrb[0].mxu0
  %v1515 = vadd.f32 0.0, %v1514
  %v1516 = vpop.f32.mrb[0].mxu0
  %1517 = vmatprep.mubr.bf16.mxu0 0
  %1518 = vmatmul.mubr.bf16.gmra.mrb[0].mxu0 %v1062
  %v1519 = vpop.f32.mrb[0].mxu0
  %v1520 = vadd.f32 0.0, %v1519
  %v1521 = vpop.f32.mrb[0].mxu0
  %v1522 = vpop.f32.mrb[0].mxu0
  %v1523 = vadd.f32 0.0, %v1522
  %v1524 = vpop.f32.mrb[0].mxu0
  %1525 = vmatprep.mubr.bf16.mxu0 0
  %1526 = vmatmul.mubr.bf16.gmra.mrb[0].mxu0 %v1063
  %v1527 = vpop.f32.mrb[0].mxu0
  %v1528 = vadd.f32 0.0, %v1527
  %v1529 = vpop.f32.mrb[0].mxu0
  %v1530 = vpop.f32.mrb[0].mxu0
  %v1531 = vadd.f32 0.0, %v1530
  %v1532 = vpop.f32.mrb[0].mxu0
  %1533 = vmatprep.mubr.bf16.mxu0 0
  %1534 = vmatmul.mubr.bf16.gmra.mrb[0].mxu0 %v1064
  %v1535 = vpop.f32.mrb[0].mxu0
  %v1536 = vadd.f32 0.0, %v1535
  %v1537 = vpop.f32.mrb[0].mxu0
  %v1538 = vpop.f32.mrb[0].mxu0
  %v1539 = vadd.f32 0.0, %v1538
  %v1540 = vpop.f32.mrb[0].mxu0
  %1541 = vmatprep.mubr.bf16.mxu0 0
  %1542 = vmatmul.mubr.bf16.gmra.mrb[0].mxu0 0
  %v1543 = vpop.f32.mrb[0].mxu0
  %v1544 = vadd.f32 0.0, %v1543
  %v1545 = vpop.f32.mrb[0].mxu0
  %v1546 = vpop.f32.mrb[0].mxu0
  %v1547 = vadd.f32 0.0, %v1546
  %v1548 = vpop.f32.mrb[0].mxu0
  %1549 = vdwg.mxu0
  %v1550 = vadd.f32 %v1326, %v1488
  %v1551 = vadd.f32 %v1329, %v1491
  %v1552 = vadd.f32 %v1334, %v1496
  %v1553 = vadd.f32 %v1337, %v1499
  %v1554 = vadd.f32 %v1342, %v1504
  %v1555 = vadd.f32 %v1345, %v1507
  %v1556 = vadd.f32 %v1350, %v1512
  %v1557 = vadd.f32 %v1353, %v1515
  %v1558 = vadd.f32 %v1358, %v1520
  %v1559 = vadd.f32 %v1361, %v1523
  %v1560 = vadd.f32 %v1366, %v1528
  %v1561 = vadd.f32 %v1369, %v1531
  %v1562 = vadd.f32 %v1374, %v1536
  %v1563 = vadd.f32 %v1377, %v1539
  %v1564 = vadd.f32 %v1382, %v1544
  %v1565 = vadd.f32 %v1385, %v1547
  %v1566 = vld [vmem:[%s4] sm:$0x1]
  %v1568 = vlaneseq
  %v1569 = vshrl.u32 %v1568, 7
  %v1570 = vsub.s32 0, %v1569
  %v1571 = vrot.slane %v1566, %v1570
  %v1573 = vadd.f32 %v1550, %v1571
  %v1574 = vadd.f32 %v1551, %v1571
  %v1575 = vadd.f32 %v1552, %v1571
  %v1576 = vadd.f32 %v1553, %v1571
  %v1577 = vadd.f32 %v1554, %v1571
  %v1578 = vadd.f32 %v1555, %v1571
  %v1579 = vadd.f32 %v1556, %v1571
  %v1580 = vadd.f32 %v1557, %v1571
  %v1581 = vadd.f32 %v1558, %v1571
  %v1582 = vadd.f32 %v1559, %v1571
  %v1583 = vadd.f32 %v1560, %v1571
  %v1584 = vadd.f32 %v1561, %v1571
  %v1585 = vadd.f32 %v1562, %v1571
  %v1586 = vadd.f32 %v1563, %v1571
  %v1587 = vadd.f32 %v1564, %v1571
  %v1588 = vadd.f32 %v1565, %v1571
  %v1589 = vmax.f32 %v1573, 0.0
  %v1590 = vmax.f32 %v1574, 0.0
  %v1591 = vmax.f32 %v1575, 0.0
  %v1592 = vmax.f32 %v1576, 0.0
  %v1593 = vmax.f32 %v1577, 0.0
  %v1594 = vmax.f32 %v1578, 0.0
  %v1595 = vmax.f32 %v1579, 0.0
  %v1596 = vmax.f32 %v1580, 0.0
  %v1597 = vmax.f32 %v1581, 0.0
  %v1598 = vmax.f32 %v1582, 0.0
  %v1599 = vmax.f32 %v1583, 0.0
  %v1600 = vmax.f32 %v1584, 0.0
  %v1601 = vmax.f32 %v1585, 0.0
  %v1602 = vmax.f32 %v1586, 0.0
  %v1603 = vmax.f32 %v1587, 0.0
  %v1604 = vmax.f32 %v1588, 0.0
  %v1605 = vmax.f32 %v1589, %v1591
  %v1606 = vmax.f32 %v1590, %v1592
  %v1607 = vmax.f32 %v1593, %v1595
  %v1608 = vmax.f32 %v1594, %v1596
  %v1609 = vmax.f32 %v1597, %v1599
  %v1610 = vmax.f32 %v1598, %v1600
  %v1611 = vmax.f32 %v1601, %v1603
  %v1612 = vmax.f32 %v1602, %v1604
  %1613 = vst [vmem:[%s5] sm:$0xff] %v1605
  %1614 = vst [vmem:[%s5 + $0x8] sm:$0xff] %v1606
  %1615 = vst [vmem:[%s5 + $0x10] sm:$0xff] %v1607
  %1616 = vst [vmem:[%s5 + $0x18] sm:$0xff] %v1608
  %1617 = vst [vmem:[%s5 + $0x20] sm:$0xff] %v1609
  %1618 = vst [vmem:[%s5 + $0x28] sm:$0xff] %v1610
  %1619 = vst [vmem:[%s5 + $0x30] sm:$0xff] %v1611
  %1620 = vst [vmem:[%s5 + $0x38] sm:$0xff] %v1612
  // Predicated region
  $region22: #{_forward_impl.1} parent=0 // pred_check
    _
  $region23: #{_forward_impl.1} parent=0 // pred_check_branch
    %1622 = sbr.rel (0) target = $region25
  $region24: #{_forward_impl.1} parent=0 // pred_region
    _
  $region25: #{_forward_impl.1} parent=0 // pred_fallthru
    _
  // Predicated region
  $region26: #{_forward_impl.1} parent=0 // pred_check
    _
  $region27: #{_forward_impl.1} parent=0 // pred_check_branch
    %1624 = sbr.rel (0) target = $region29
  $region28: #{_forward_impl.1} parent=0 // pred_region
    _
  $region29: #{_forward_impl.1} parent=0 // pred_fallthru
    _

</llo_original>
